<compile_context>
chip_gen: v5e
topology: v5e:2x2
jax: 0.10.0
libtpu: 0.0.40
codegen_flags: <defaults>
</compile_context>

<pallas_src>
import functools

import jax
import jax.numpy as jnp
from jax.experimental import pallas as pl
from jax.experimental.pallas import tpu as pltpu


def _round_up(x, m):
    return (x + m - 1) // m * m


# ------------------------------ fused Pallas kernel ------------------------------

def _conv_bn_relu_kernel(x_ref, w_ref, scale_ref, shift_ref, o_ref, col_ref, *,
                         bt, cin, w_img, k, m_out):
    """One batch tile (bt images) per grid step.

    x_ref     : (bt, m_in, Cin)        NHWC image(s), spatial flattened onto rows, row halo of
                                       (k-1)*W + (k-1) zero rows appended per image
    w_ref     : (k*k*Cin, Cout_pad)    dense conv weight, taps stacked along K
    scale_ref : (1, Cout_pad)  f32     BN scale  gamma * rsqrt(var + eps)
    shift_ref : (1, Cout_pad)  f32     BN shift  beta - mean * scale
    o_ref     : (bt, m_out, Cout_pad)  fused conv + BN + ReLU output slab (dense stores)
    col_ref   : (m_out, k*k*Cin)       VMEM scratch for the staged conv window
    """
    for b in range(bt):
        # Stage the k*k statically shifted copies of this image into scratch once,
        # outside the matmul (all 36 lanes are rewritten every image -> no stale reads).
        for kh in range(k):
            for kw in range(k):
                idx = kh * k + kw
                s = kh * w_img + kw                       # row shift in flattened (h*W + w)
                col_ref[:, idx * cin:(idx + 1) * cin] = x_ref[b, s:s + m_out, :]
        # One MXU GEMM per image: (m_out, k*k*Cin) @ (k*k*Cin, Cout_pad), f32 accumulate.
        y = jnp.dot(col_ref[...], w_ref[...], preferred_element_type=jnp.float32)
        # Inference BatchNorm as a per-channel f32 affine + ReLU, fused in the epilogue.
        o_ref[b] = jnp.maximum(y * scale_ref[...] + shift_ref[...], 0.0)


# --------------------------------- wrappers ---------------------------------

def conv_bn_relu_nhwc(x_nhwc, params, *, k, eps=1e-5,
                      compute_dtype=jnp.bfloat16, bt=None):
    """Fused ConvModule forward, NHWC in / NHWC out (native layout, no transposes)."""
    # TODO(synk): training-mode BatchNorm (batch statistics + running-stat updates) is not
    # implemented; only the inference-mode forward is fused here.
    B, H, W, Cin = x_nhwc.shape
    Cout = params["conv_w"].shape[0]
    assert params["conv_w"].shape == (Cout, Cin, k, k)
    Ho, Wo = H - k + 1, W - k + 1

    m_out = _round_up(H * W, 8)                   # sublane-dense output rows per image
    s_max = (k - 1) * W + (k - 1)                 # largest tap shift
    m_in = _round_up(m_out + s_max, 8)            # input rows incl. zero halo
    cout_pad = _round_up(Cout, 128)               # lane-dense output / N dimension
    kk_cin = k * k * Cin

    if bt is None:                                # pack images per step until M >= 256 rows
        bt = 1
        while bt * 2 <= B and B % (bt * 2) == 0 and bt * m_out < 256:
            bt *= 2
    assert B % bt == 0

    # ---- trace-time constant prep: dense weight (taps stacked on K), f32 BN affine ----
    w = jnp.transpose(params["conv_w"], (2, 3, 1, 0)).reshape(kk_cin, Cout)   # (kh,kw,ci,co)
    w = jnp.pad(w, ((0, 0), (0, cout_pad - Cout))).astype(compute_dtype)
    scale = params["bn_gamma"] * jax.lax.rsqrt(params["bn_var"] + eps)        # (Cout,)
    shift = params["bn_beta"] - params["bn_mean"] * scale
    scale = jnp.pad(scale, (0, cout_pad - Cout)).reshape(1, cout_pad).astype(jnp.float32)
    shift = jnp.pad(shift, (0, cout_pad - Cout)).reshape(1, cout_pad).astype(jnp.float32)

    # ---- activation prep: flatten spatial onto rows, append a zero row halo per image ----
    x = x_nhwc.reshape(B, H * W, Cin)
    x = jnp.pad(x, ((0, 0), (0, m_in - H * W), (0, 0))).astype(compute_dtype)

    out = pl.pallas_call(
        functools.partial(_conv_bn_relu_kernel,
                          bt=bt, cin=Cin, w_img=W, k=k, m_out=m_out),
        out_shape=jax.ShapeDtypeStruct((B, m_out, cout_pad), jnp.float32),
        grid=(B // bt,),
        in_specs=[
            pl.BlockSpec((bt, m_in, Cin), lambda i: (i, 0, 0)),
            pl.BlockSpec((kk_cin, cout_pad), lambda i: (0, 0)),
            pl.BlockSpec((1, cout_pad), lambda i: (0, 0)),
            pl.BlockSpec((1, cout_pad), lambda i: (0, 0)),
        ],
        out_specs=pl.BlockSpec((bt, m_out, cout_pad), lambda i: (i, 0, 0)),
        scratch_shapes=[pltpu.VMEM((m_out, kk_cin), compute_dtype)],
        compiler_params=pltpu.CompilerParams(dimension_semantics=("parallel",)),
    )(x, w, scale, shift)

    # Valid outputs are rows m = h*W + w with h < Ho, w < Wo and channels < Cout; the padded
    # rows/lanes are written dense in the kernel and sliced off here (fuses with downstream ops).
    out = out[:, :H * W, :Cout].reshape(B, H, W, Cout)
    return out[:, :Ho, :Wo, :]


def conv_module_forward(x_nchw, params, *, k, eps=1e-5, compute_dtype=jnp.bfloat16):
    """Torch-boundary adapter (NCHW in / NCHW out). In a full network keep NHWC end-to-end."""
    x = jnp.transpose(x_nchw, (0, 2, 3, 1))
    y = conv_bn_relu_nhwc(x, params, k=k, eps=eps, compute_dtype=compute_dtype)
    return jnp.transpose(y, (0, 3, 1, 2))


# ------------------------------- pure-JAX reference -------------------------------

def ref_forward(x_nchw, params, *, k, eps=1e-5):
    hi = jax.lax.Precision.HIGHEST
    x = jnp.transpose(x_nchw, (0, 2, 3, 1))
    w = jnp.transpose(params["conv_w"], (2, 3, 1, 0))       # OIHW -> HWIO
    y = jax.lax.conv_general_dilated(
        x, w, (1, 1), "VALID",
        dimension_numbers=("NHWC", "HWIO", "NHWC"), precision=hi)
    s = params["bn_gamma"] * jax.lax.rsqrt(params["bn_var"] + eps)
    y = (y - params["bn_mean"]) * s + params["bn_beta"]
    y = jnp.maximum(y, 0.0)
    return jnp.transpose(y, (0, 3, 1, 2))


# --------------------------------------- main --------------------------------------

if __name__ == "__main__":
    B, Cin, H, W = 2, 4, 16, 16
    Cout, k = 16, 3

    key = jax.random.PRNGKey(0)
    kx, kw_, kg, kb, km, kv = jax.random.split(key, 6)
    x = jax.random.normal(kx, (B, Cin, H, W), jnp.float32)
    params = {
        "conv_w": 0.1 * jax.random.normal(kw_, (Cout, Cin, k, k), jnp.float32),
        "bn_gamma": 1.0 + 0.1 * jax.random.normal(kg, (Cout,), jnp.float32),
        "bn_beta": 0.1 * jax.random.normal(kb, (Cout,), jnp.float32),
        "bn_mean": 0.1 * jax.random.normal(km, (Cout,), jnp.float32),
        "bn_var": 1.0 + 0.1 * jnp.abs(jax.random.normal(kv, (Cout,), jnp.float32)),
    }

    ref = ref_forward(x, params, k=k)

    # Exact-semantics path (f32 MXU operands): tight tolerance vs the f32 reference.
    fwd_f32 = jax.jit(functools.partial(conv_module_forward, k=k, compute_dtype=jnp.float32))
    out_f32 = jax.block_until_ready(fwd_f32(x, params))
    assert out_f32.shape == (B, Cout, H - k + 1, W - k + 1)
    err_f32 = float(jnp.max(jnp.abs(out_f32 - ref)))
    if err_f32 > 2e-3:
        raise AssertionError(f"f32 path mismatch vs reference, max abs err = {err_f32}")

    # Fast path (bf16 MXU operands, f32 BN/ReLU epilogue): bf16-rounding tolerance.
    fwd_bf16 = jax.jit(functools.partial(conv_module_forward, k=k, compute_dtype=jnp.bfloat16))
    out_bf16 = jax.block_until_ready(fwd_bf16(x, params))
    err_bf16 = float(jnp.max(jnp.abs(out_bf16 - ref)))
    if err_bf16 > 5e-2:
        raise AssertionError(f"bf16 path mismatch vs reference, max abs err = {err_bf16}")

    print("KERNEL_OK")
</pallas_src>

<mosaic_0001>
module attributes {stable_mosaic.version = 11 : i64} {
  func.func @_conv_bn_relu_kernel(%arg0: i32, %arg1: memref<1x296x4xf32, #tpu.memory_space<vmem>>, %arg2: memref<36x128xf32, #tpu.memory_space<vmem>>, %arg3: memref<1x128xf32, #tpu.memory_space<vmem>>, %arg4: memref<1x128xf32, #tpu.memory_space<vmem>>, %arg5: memref<1x256x128xf32, #tpu.memory_space<vmem>>, %arg6: memref<256x36xf32, #tpu.memory_space<vmem>>) attributes {dimension_semantics = [#tpu.dimension_semantics<parallel>], iteration_bounds = array<i64: 2>, scalar_prefetch = 0 : i64, scratch_operands = 1 : i64, tpu.core_type = #tpu.core_type<tc>, window_params = [{transform_indices = @transform_0, window_bounds = array<i64: 1, 296, 4>}, {pipeline_mode = #tpu.pipeline_mode<synchronous>, transform_indices = @transform_1, window_bounds = array<i64: 36, 128>}, {pipeline_mode = #tpu.pipeline_mode<synchronous>, transform_indices = @transform_2, window_bounds = array<i64: 1, 128>}, {pipeline_mode = #tpu.pipeline_mode<synchronous>, transform_indices = @transform_3, window_bounds = array<i64: 1, 128>}, {transform_indices = @transform_4, window_bounds = array<i64: 1, 256, 128>}]} {
    %c0 = arith.constant 0 : index
    %c0_0 = arith.constant 0 : index
    %c0_1 = arith.constant 0 : index
    %0 = vector.load %arg1[%c0, %c0_0, %c0_1] : memref<1x296x4xf32, #tpu.memory_space<vmem>>, vector<1x256x4xf32>
    %1 = vector.shape_cast %0 : vector<1x256x4xf32> to vector<256x4xf32>
    %c0_2 = arith.constant 0 : index
    %c0_3 = arith.constant 0 : index
    %2 = vector.load %arg6[%c0_2, %c0_3] : memref<256x36xf32, #tpu.memory_space<vmem>>, vector<256x4xf32>
    tpu.vector_store %arg6[%c0_2, %c0_3], %1 {strides = array<i32>} : memref<256x36xf32, #tpu.memory_space<vmem>>, vector<256x4xf32>,
    %c0_4 = arith.constant 0 : index
    %c1 = arith.constant 1 : index
    %c0_5 = arith.constant 0 : index
    %3 = vector.load %arg1[%c0_4, %c1, %c0_5] : memref<1x296x4xf32, #tpu.memory_space<vmem>>, vector<1x256x4xf32>
    %4 = vector.shape_cast %3 : vector<1x256x4xf32> to vector<256x4xf32>
    %c0_6 = arith.constant 0 : index
    %c4 = arith.constant 4 : index
    %5 = vector.load %arg6[%c0_6, %c4] : memref<256x36xf32, #tpu.memory_space<vmem>>, vector<256x4xf32>
    tpu.vector_store %arg6[%c0_6, %c4], %4 {strides = array<i32>} : memref<256x36xf32, #tpu.memory_space<vmem>>, vector<256x4xf32>,
    %c0_7 = arith.constant 0 : index
    %c2 = arith.constant 2 : index
    %c0_8 = arith.constant 0 : index
    %6 = vector.load %arg1[%c0_7, %c2, %c0_8] : memref<1x296x4xf32, #tpu.memory_space<vmem>>, vector<1x256x4xf32>
    %7 = vector.shape_cast %6 : vector<1x256x4xf32> to vector<256x4xf32>
    %c0_9 = arith.constant 0 : index
    %c8 = arith.constant 8 : index
    %8 = vector.load %arg6[%c0_9, %c8] : memref<256x36xf32, #tpu.memory_space<vmem>>, vector<256x4xf32>
    tpu.vector_store %arg6[%c0_9, %c8], %7 {strides = array<i32>} : memref<256x36xf32, #tpu.memory_space<vmem>>, vector<256x4xf32>,
    %c0_10 = arith.constant 0 : index
    %c16 = arith.constant 16 : index
    %c0_11 = arith.constant 0 : index
    %9 = vector.load %arg1[%c0_10, %c16, %c0_11] : memref<1x296x4xf32, #tpu.memory_space<vmem>>, vector<1x256x4xf32>
    %10 = vector.shape_cast %9 : vector<1x256x4xf32> to vector<256x4xf32>
    %c0_12 = arith.constant 0 : index
    %c12 = arith.constant 12 : index
    %11 = vector.load %arg6[%c0_12, %c12] : memref<256x36xf32, #tpu.memory_space<vmem>>, vector<256x4xf32>
    tpu.vector_store %arg6[%c0_12, %c12], %10 {strides = array<i32>} : memref<256x36xf32, #tpu.memory_space<vmem>>, vector<256x4xf32>,
    %c0_13 = arith.constant 0 : index
    %c17 = arith.constant 17 : index
    %c0_14 = arith.constant 0 : index
    %12 = vector.load %arg1[%c0_13, %c17, %c0_14] : memref<1x296x4xf32, #tpu.memory_space<vmem>>, vector<1x256x4xf32>
    %13 = vector.shape_cast %12 : vector<1x256x4xf32> to vector<256x4xf32>
    %c0_15 = arith.constant 0 : index
    %c16_16 = arith.constant 16 : index
    %14 = vector.load %arg6[%c0_15, %c16_16] : memref<256x36xf32, #tpu.memory_space<vmem>>, vector<256x4xf32>
    tpu.vector_store %arg6[%c0_15, %c16_16], %13 {strides = array<i32>} : memref<256x36xf32, #tpu.memory_space<vmem>>, vector<256x4xf32>,
    %c0_17 = arith.constant 0 : index
    %c18 = arith.constant 18 : index
    %c0_18 = arith.constant 0 : index
    %15 = vector.load %arg1[%c0_17, %c18, %c0_18] : memref<1x296x4xf32, #tpu.memory_space<vmem>>, vector<1x256x4xf32>
    %16 = vector.shape_cast %15 : vector<1x256x4xf32> to vector<256x4xf32>
    %c0_19 = arith.constant 0 : index
    %c20 = arith.constant 20 : index
    %17 = vector.load %arg6[%c0_19, %c20] : memref<256x36xf32, #tpu.memory_space<vmem>>, vector<256x4xf32>
    tpu.vector_store %arg6[%c0_19, %c20], %16 {strides = array<i32>} : memref<256x36xf32, #tpu.memory_space<vmem>>, vector<256x4xf32>,
    %c0_20 = arith.constant 0 : index
    %c32 = arith.constant 32 : index
    %c0_21 = arith.constant 0 : index
    %18 = vector.load %arg1[%c0_20, %c32, %c0_21] : memref<1x296x4xf32, #tpu.memory_space<vmem>>, vector<1x256x4xf32>
    %19 = vector.shape_cast %18 : vector<1x256x4xf32> to vector<256x4xf32>
    %c0_22 = arith.constant 0 : index
    %c24 = arith.constant 24 : index
    %20 = vector.load %arg6[%c0_22, %c24] : memref<256x36xf32, #tpu.memory_space<vmem>>, vector<256x4xf32>
    tpu.vector_store %arg6[%c0_22, %c24], %19 {strides = array<i32>} : memref<256x36xf32, #tpu.memory_space<vmem>>, vector<256x4xf32>,
    %c0_23 = arith.constant 0 : index
    %c33 = arith.constant 33 : index
    %c0_24 = arith.constant 0 : index
    %21 = vector.load %arg1[%c0_23, %c33, %c0_24] : memref<1x296x4xf32, #tpu.memory_space<vmem>>, vector<1x256x4xf32>
    %22 = vector.shape_cast %21 : vector<1x256x4xf32> to vector<256x4xf32>
    %c0_25 = arith.constant 0 : index
    %c28 = arith.constant 28 : index
    %23 = vector.load %arg6[%c0_25, %c28] : memref<256x36xf32, #tpu.memory_space<vmem>>, vector<256x4xf32>
    tpu.vector_store %arg6[%c0_25, %c28], %22 {strides = array<i32>} : memref<256x36xf32, #tpu.memory_space<vmem>>, vector<256x4xf32>,
    %c0_26 = arith.constant 0 : index
    %c34 = arith.constant 34 : index
    %c0_27 = arith.constant 0 : index
    %24 = vector.load %arg1[%c0_26, %c34, %c0_27] : memref<1x296x4xf32, #tpu.memory_space<vmem>>, vector<1x256x4xf32>
    %25 = vector.shape_cast %24 : vector<1x256x4xf32> to vector<256x4xf32>
    %c0_28 = arith.constant 0 : index
    %c32_29 = arith.constant 32 : index
    %26 = vector.load %arg6[%c0_28, %c32_29] : memref<256x36xf32, #tpu.memory_space<vmem>>, vector<256x4xf32>
    tpu.vector_store %arg6[%c0_28, %c32_29], %25 {strides = array<i32>} : memref<256x36xf32, #tpu.memory_space<vmem>>, vector<256x4xf32>,
    %c0_30 = arith.constant 0 : index
    %c0_31 = arith.constant 0 : index
    %27 = vector.load %arg6[%c0_30, %c0_31] : memref<256x36xf32, #tpu.memory_space<vmem>>, vector<256x36xf32>
    %c0_32 = arith.constant 0 : index
    %c0_33 = arith.constant 0 : index
    %28 = vector.load %arg2[%c0_32, %c0_33] : memref<36x128xf32, #tpu.memory_space<vmem>>, vector<36x128xf32>
    %cst = arith.constant dense<0.000000e+00> : vector<256x128xf32>
    %29 = tpu.matmul %27, %28, %cst {dimension_numbers = #tpu.dot_dimension_numbers<[1], [0], [0], [1], [0, 0, 1, 1], [], []>} : vector<256x36xf32>, vector<36x128xf32>, vector<256x128xf32> -> vector<256x128xf32>
    %c0_34 = arith.constant 0 : index
    %c0_35 = arith.constant 0 : index
    %30 = vector.load %arg3[%c0_34, %c0_35] : memref<1x128xf32, #tpu.memory_space<vmem>>, vector<1x128xf32>
    %31 = vector.broadcast %30 : vector<1x128xf32> to vector<256x128xf32>
    %32 = arith.mulf %29, %31 : vector<256x128xf32>
    %c0_36 = arith.constant 0 : index
    %c0_37 = arith.constant 0 : index
    %33 = vector.load %arg4[%c0_36, %c0_37] : memref<1x128xf32, #tpu.memory_space<vmem>>, vector<1x128xf32>
    %34 = vector.broadcast %33 : vector<1x128xf32> to vector<256x128xf32>
    %35 = arith.addf %32, %34 : vector<256x128xf32>
    %cst_38 = arith.constant 0.000000e+00 : f32
    %36 = vector.broadcast %cst_38 : f32 to vector<256x128xf32>
    %37 = arith.maximumf %35, %36 : vector<256x128xf32>
    %c0_39 = arith.constant 0 : index
    %c0_40 = arith.constant 0 : index
    %c0_41 = arith.constant 0 : index
    %38 = vector.load %arg5[%c0_39, %c0_40, %c0_41] : memref<1x256x128xf32, #tpu.memory_space<vmem>>, vector<1x256x128xf32>
    %39 = vector.shape_cast %38 : vector<1x256x128xf32> to vector<256x128xf32>
    %40 = vector.shape_cast %37 : vector<256x128xf32> to vector<1x256x128xf32>
    tpu.vector_store %arg5[%c0_39, %c0_40, %c0_41], %40 {strides = array<i32>} : memref<1x256x128xf32, #tpu.memory_space<vmem>>, vector<1x256x128xf32>,
    return
  }
  func.func @transform_0(%arg0: i32) -> (i32, i32, i32) {
    %c0_i32 = arith.constant 0 : i32
    %c0_i32_0 = arith.constant 0 : i32
    %c0_i32_1 = arith.constant 0 : i32
    return %arg0, %c0_i32, %c0_i32_0 : i32, i32, i32
  }
  func.func @transform_1(%arg0: i32) -> (i32, i32) {
    %c0_i32 = arith.constant 0 : i32
    %c0_i32_0 = arith.constant 0 : i32
    %c0_i32_1 = arith.constant 0 : i32
    return %c0_i32, %c0_i32_0 : i32, i32
  }
  func.func @transform_2(%arg0: i32) -> (i32, i32) {
    %c0_i32 = arith.constant 0 : i32
    %c0_i32_0 = arith.constant 0 : i32
    %c0_i32_1 = arith.constant 0 : i32
    return %c0_i32, %c0_i32_0 : i32, i32
  }
  func.func @transform_3(%arg0: i32) -> (i32, i32) {
    %c0_i32 = arith.constant 0 : i32
    %c0_i32_0 = arith.constant 0 : i32
    %c0_i32_1 = arith.constant 0 : i32
    return %c0_i32, %c0_i32_0 : i32, i32
  }
  func.func @transform_4(%arg0: i32) -> (i32, i32, i32) {
    %c0_i32 = arith.constant 0 : i32
    %c0_i32_0 = arith.constant 0 : i32
    %c0_i32_1 = arith.constant 0 : i32
    return %arg0, %c0_i32, %c0_i32_0 : i32, i32, i32
  }
}

</mosaic_0001>

<llo_original>
// kernel: conv_module_forward.1
$region0: #{conv_module_forward.1}
  #allocation0 [shape = 'u32[]', space=smem, size = 0x4, offset = 0x4, fixed_abs, tag = 'smem constant byte address 0x4 - core index']
  #allocation1 [shape = 'u32[72,128]{1,0:T(1,128)}', space=vmem, size = 0x9000, scoped, tag = 'internal scratch']
  #allocation2 [shape = 'f32[256,36]{1,0:T(8,128)}', space=vmem, size = 0x20000, scoped, tag = 'scratch operand']
  %s0 = inlined_call_operand.vmem [shape: f32[2,296,4], index: 0, kind: input, shape index: {}]
  %s1 = inlined_call_operand.vmem [shape: f32[36,128], index: 1, kind: input, shape index: {}]
  %s2 = inlined_call_operand.vmem [shape: f32[1,128], index: 2, kind: input, shape index: {}]
  %s3 = inlined_call_operand.vmem [shape: f32[1,128], index: 3, kind: input, shape index: {}]
  %s4 = inlined_call_operand.vmem [shape: f32[2,256,128], index: 4, kind: output, shape index: {}]
  %s5 = sld [smem:[#allocation0]]
  $region49: #{conv_module_forward.1} parent=0
    _
  %s7 = ssub.s32 1, %s5
  %s8 = scalar_select 0, %s7, %s5
  loop: start=0, step=1, limit=4
  $region2: #{conv_module_forward.1} parent=0 // loop_pre_header
    _
  $region3: #{conv_module_forward.1} parent=0 // loop_header
    %s10 = sphi 0, %s14
    %p11 = scmp.ge.s32.totalorder %s10, 4
    %s20 = sphi 0, %s22
    %s23 = sphi 0, %s20
    %s24 = sphi 0, %s23
    %s40 = sphi 0, %s24
    %s44 = sphi 0, %s44
    %s46 = sphi 0, %s44
    %s47 = sphi 0, %s46
    %s61 = sphi 0, %s47
    %s65 = sphi 0, %s65
    %s67 = sphi 0, %s65
    %s68 = sphi 0, %s67
    %s82 = sphi 0, %s68
    %s86 = sphi 0, %s86
    %s88 = sphi 0, %s86
    %s89 = sphi 0, %s88
    %s103 = sphi 0, %s89
    %s109 = sphi 0, %s111
    %s112 = sphi 0, %s109
    %s113 = sphi 0, %s112
    %s129 = sphi 0, %s113
  $region4: #{conv_module_forward.1} parent=0 // loop_header_branch
    %13 = sbr.rel (%p11) target = $region8
  $region5: #{conv_module_forward.1} parent=0 // loop_body
    %s15 = ssub.s32 %s10, 1
    %s16 = ssub.s32 %s10, 2
    %s17 = sadd.s32 %s10, 1
    %s18 = ssub.s32 %s10, %s17
    %p19 = scmp.eq.s32.totalorder %s18, 0
    %s21 = sadd.s32 %s20, 1
    %s22 = scalar_select %p19, %s20, %s21
    %p25 = pneg %p19
    %p26 = scmp.eq.s32.totalorder %s10, 1
    %p27 = por %p25, %p26
    %p28 = scmp.ne.s32.totalorder %s20, %s23
    %p29 = scmp.eq.s32.totalorder %s10, 0
    %p30 = por %p28, %p29
    %p31 = scmp.ne.s32.totalorder %s20, %s23
    %p32 = scmp.eq.s32.totalorder %s15, 1
    %p33 = por %p31, %p32
    %p34 = scmp.ne.s32.totalorder %s23, %s24
    %p35 = scmp.eq.s32.totalorder %s15, 0
    %p36 = por %p34, %p35
    %p37 = scmp.ne.s32.totalorder %s23, %s24
    %p38 = scmp.eq.s32.totalorder %s16, 1
    %p39 = por %p37, %p38
    %p41 = scmp.ne.s32.totalorder %s24, %s40
    %p42 = scmp.eq.s32.totalorder %s16, 0
    %p43 = por %p41, %p42
    %s45 = sadd.s32 %s44, 1
    %p48 = scmp.eq.s32.totalorder %s10, 1
    %p49 = scmp.ne.s32.totalorder %s44, %s46
    %p50 = scmp.eq.s32.totalorder %s10, 0
    %p51 = por %p49, %p50
    %p52 = scmp.ne.s32.totalorder %s44, %s46
    %p53 = scmp.eq.s32.totalorder %s15, 1
    %p54 = por %p52, %p53
    %p55 = scmp.ne.s32.totalorder %s46, %s47
    %p56 = scmp.eq.s32.totalorder %s15, 0
    %p57 = por %p55, %p56
    %p58 = scmp.ne.s32.totalorder %s46, %s47
    %p59 = scmp.eq.s32.totalorder %s16, 1
    %p60 = por %p58, %p59
    %p62 = scmp.ne.s32.totalorder %s47, %s61
    %p63 = scmp.eq.s32.totalorder %s16, 0
    %p64 = por %p62, %p63
    %s66 = sadd.s32 %s65, 1
    %p69 = scmp.eq.s32.totalorder %s10, 1
    %p70 = scmp.ne.s32.totalorder %s65, %s67
    %p71 = scmp.eq.s32.totalorder %s10, 0
    %p72 = por %p70, %p71
    %p73 = scmp.ne.s32.totalorder %s65, %s67
    %p74 = scmp.eq.s32.totalorder %s15, 1
    %p75 = por %p73, %p74
    %p76 = scmp.ne.s32.totalorder %s67, %s68
    %p77 = scmp.eq.s32.totalorder %s15, 0
    %p78 = por %p76, %p77
    %p79 = scmp.ne.s32.totalorder %s67, %s68
    %p80 = scmp.eq.s32.totalorder %s16, 1
    %p81 = por %p79, %p80
    %p83 = scmp.ne.s32.totalorder %s68, %s82
    %p84 = scmp.eq.s32.totalorder %s16, 0
    %p85 = por %p83, %p84
    %s87 = sadd.s32 %s86, 1
    %p90 = scmp.eq.s32.totalorder %s10, 1
    %p91 = scmp.ne.s32.totalorder %s86, %s88
    %p92 = scmp.eq.s32.totalorder %s10, 0
    %p93 = por %p91, %p92
    %p94 = scmp.ne.s32.totalorder %s86, %s88
    %p95 = scmp.eq.s32.totalorder %s15, 1
    %p96 = por %p94, %p95
    %p97 = scmp.ne.s32.totalorder %s88, %s89
    %p98 = scmp.eq.s32.totalorder %s15, 0
    %p99 = por %p97, %p98
    %p100 = scmp.ne.s32.totalorder %s88, %s89
    %p101 = scmp.eq.s32.totalorder %s16, 1
    %p102 = por %p100, %p101
    %p104 = scmp.ne.s32.totalorder %s89, %s103
    %p105 = scmp.eq.s32.totalorder %s16, 0
    %p106 = por %p104, %p105
    %s107 = ssub.s32 %s10, %s17
    %p108 = scmp.eq.s32.totalorder %s107, 0
    %s110 = sadd.s32 %s109, 1
    %s111 = scalar_select %p108, %s109, %s110
    %p114 = pneg %p108
    %p115 = scmp.eq.s32.totalorder %s10, 1
    %p116 = por %p114, %p115
    %p117 = scmp.ne.s32.totalorder %s109, %s112
    %p118 = scmp.eq.s32.totalorder %s10, 0
    %p119 = por %p117, %p118
    %p120 = scmp.ne.s32.totalorder %s109, %s112
    %p121 = scmp.eq.s32.totalorder %s15, 1
    %p122 = por %p120, %p121
    %p123 = scmp.ne.s32.totalorder %s112, %s113
    %p124 = scmp.eq.s32.totalorder %s15, 0
    %p125 = por %p123, %p124
    %p126 = scmp.ne.s32.totalorder %s112, %s113
    %p127 = scmp.eq.s32.totalorder %s16, 1
    %p128 = por %p126, %p127
    %p130 = scmp.ne.s32.totalorder %s113, %s129
    %p131 = scmp.eq.s32.totalorder %s16, 0
    %p132 = por %p130, %p131
    %p133 = scmp.le.s32.totalorder 1, %s10
    %p134 = scmp.lt.s32.totalorder %s10, 3
    %p135 = pnand %p133, %p134
    %p136 = pneg %p135
    // Predicated region
    $region9: #{conv_module_forward.1} parent=5 // pred_check
      _
    $region10: #{conv_module_forward.1} parent=5 // pred_check_branch
      %138 = sbr.rel (%p135) target = $region12
    $region11: #{conv_module_forward.1} parent=5 // pred_region
      %s139 = ssub.s32 %s10, 1
      // Predicated region
      $region13: #{conv_module_forward.1} parent=11 // pred_check
        %p140 = pneg %p57
      $region14: #{conv_module_forward.1} parent=11 // pred_check_branch
        %142 = sbr.rel (%p140) target = $region16
      $region15: #{conv_module_forward.1} parent=11 // pred_region
        _
      $region16: #{conv_module_forward.1} parent=11 // pred_fallthru
        _
      // Predicated region
      $region17: #{conv_module_forward.1} parent=11 // pred_check
        %p143 = pneg %p78
      $region18: #{conv_module_forward.1} parent=11 // pred_check_branch
        %145 = sbr.rel (%p143) target = $region20
      $region19: #{conv_module_forward.1} parent=11 // pred_region
        _
      $region20: #{conv_module_forward.1} parent=11 // pred_fallthru
        _
      // Predicated region
      $region21: #{conv_module_forward.1} parent=11 // pred_check
        %p146 = pneg %p99
      $region22: #{conv_module_forward.1} parent=11 // pred_check_branch
        %148 = sbr.rel (%p146) target = $region24
      $region23: #{conv_module_forward.1} parent=11 // pred_region
        _
      $region24: #{conv_module_forward.1} parent=11 // pred_fallthru
        _
    $region12: #{conv_module_forward.1} parent=5 // pred_fallthru
      _
    %p149 = scmp.lt.s32.totalorder %s10, 2
    // Predicated region
    $region25: #{conv_module_forward.1} parent=5 // pred_check
      %p150 = pneg %p149
    $region26: #{conv_module_forward.1} parent=5 // pred_check_branch
      %152 = sbr.rel (%p150) target = $region28
    $region27: #{conv_module_forward.1} parent=5 // pred_region
      // Predicated region
      $region29: #{conv_module_forward.1} parent=27 // pred_check
        %p153 = pneg %p30
      $region30: #{conv_module_forward.1} parent=27 // pred_check_branch
        %155 = sbr.rel (%p153) target = $region32
      $region31: #{conv_module_forward.1} parent=27 // pred_region
        %p156 = scmp.lt.s32.totalorder %s10, 1
        %s157 = scalar_select %p156, %s10, 1
        %s158 = smul.addr %s157, 37
        %s159 = smul.addr %s158, 8
        %s160 = scalar_lea.vmem %s0, %s159
      $region32: #{conv_module_forward.1} parent=27 // pred_fallthru
        _
    $region28: #{conv_module_forward.1} parent=5 // pred_fallthru
      _
    %p161 = scmp.le.s32.totalorder 1, %s10
    %p162 = scmp.lt.s32.totalorder %s10, 3
    %p163 = pnand %p161, %p162
    %p164 = pneg %p163
    // Predicated region
    $region33: #{conv_module_forward.1} parent=5 // pred_check
      _
    $region34: #{conv_module_forward.1} parent=5 // pred_check_branch
      %166 = sbr.rel (%p163) target = $region36
    $region35: #{conv_module_forward.1} parent=5 // pred_region
      %s167 = ssub.s32 %s10, 1
      %p168 = scmp.lt.s32.totalorder %s15, 1
      %s169 = scalar_select %p168, %s15, 1
      %s170 = smul.addr %s169, 37
      %s171 = smul.addr %s170, 8
      %s172 = scalar_lea.vmem %s0, %s171
      %p173 = pneg %p36
      %p174 = pneg %p33
      %p175 = pneg %p57
      %p176 = pneg %p54
      %p177 = pneg %p78
      %p178 = pneg %p75
      %p179 = pneg %p99
      %p180 = pneg %p96
      %p181 = pneg %p125
      %p182 = pneg %p122
      %p183 = scmp.lt.s32.totalorder %s15, 1
      %s184 = scalar_select %p183, %s15, 1
      %s185 = smul.addr %s184, 32
      %s186 = smul.addr %s185, 8
      %s187 = scalar_lea.vmem %s4, %s186
      %p188 = scmp.lt.s32.totalorder %s15, 1
      %s189 = scalar_select %p188, %s15, 1
      %s190 = smul.addr %s189, 37
      %s191 = smul.addr %s190, 8
      %s192 = scalar_lea.vmem %s0, %s191
      %p193 = scmp.lt.s32.totalorder %s15, 1
      %s194 = scalar_select %p193, %s15, 1
      %s195 = smul.addr %s194, 32
      %s196 = smul.addr %s195, 8
      %s197 = scalar_lea.vmem %s4, %s196
      %v198 = vld [vmem:[%s192] sm:$0xff]
      %v199 = vld [vmem:[%s192 + $0x8] sm:$0xff]
      %v200 = vld [vmem:[%s192 + $0x10] sm:$0xff]
      %v201 = vld [vmem:[%s192 + $0x18] sm:$0xff]
      %v202 = vld [vmem:[%s192 + $0x20] sm:$0xff]
      %v203 = vld [vmem:[%s192 + $0x28] sm:$0xff]
      %v204 = vld [vmem:[%s192 + $0x30] sm:$0xff]
      %v205 = vld [vmem:[%s192 + $0x38] sm:$0xff]
      %v206 = vld [vmem:[%s192 + $0x40] sm:$0xff]
      %v207 = vld [vmem:[%s192 + $0x48] sm:$0xff]
      %v208 = vld [vmem:[%s192 + $0x50] sm:$0xff]
      %v209 = vld [vmem:[%s192 + $0x58] sm:$0xff]
      %v210 = vld [vmem:[%s192 + $0x60] sm:$0xff]
      %v211 = vld [vmem:[%s192 + $0x68] sm:$0xff]
      %v212 = vld [vmem:[%s192 + $0x70] sm:$0xff]
      %v213 = vld [vmem:[%s192 + $0x78] sm:$0xff]
      %v214 = vld [vmem:[%s192 + $0x80] sm:$0xff]
      %v215 = vld [vmem:[%s192 + $0x88] sm:$0xff]
      %v216 = vld [vmem:[%s192 + $0x90] sm:$0xff]
      %v217 = vld [vmem:[%s192 + $0x98] sm:$0xff]
      %v218 = vld [vmem:[%s192 + $0xa0] sm:$0xff]
      %v219 = vld [vmem:[%s192 + $0xa8] sm:$0xff]
      %v220 = vld [vmem:[%s192 + $0xb0] sm:$0xff]
      %v221 = vld [vmem:[%s192 + $0xb8] sm:$0xff]
      %v222 = vld [vmem:[%s192 + $0xc0] sm:$0xff]
      %v223 = vld [vmem:[%s192 + $0xc8] sm:$0xff]
      %v224 = vld [vmem:[%s192 + $0xd0] sm:$0xff]
      %v225 = vld [vmem:[%s192 + $0xd8] sm:$0xff]
      %v226 = vld [vmem:[%s192 + $0xe0] sm:$0xff]
      %v227 = vld [vmem:[%s192 + $0xe8] sm:$0xff]
      %v228 = vld [vmem:[%s192 + $0xf0] sm:$0xff]
      %v229 = vld [vmem:[%s192 + $0xf8] sm:$0xff]
      %vm230 = vcmask 31744
      %231 = vst.msk [vmem:[#allocation2] sm:$0xff] %vm230, %v198
      %232 = vst.msk [vmem:[#allocation2 + $0x8] sm:$0xff] %vm230, %v199
      %233 = vst.msk [vmem:[#allocation2 + $0x10] sm:$0xff] %vm230, %v200
      %234 = vst.msk [vmem:[#allocation2 + $0x18] sm:$0xff] %vm230, %v201
      %235 = vst.msk [vmem:[#allocation2 + $0x20] sm:$0xff] %vm230, %v202
      %236 = vst.msk [vmem:[#allocation2 + $0x28] sm:$0xff] %vm230, %v203
      %237 = vst.msk [vmem:[#allocation2 + $0x30] sm:$0xff] %vm230, %v204
      %238 = vst.msk [vmem:[#allocation2 + $0x38] sm:$0xff] %vm230, %v205
      %239 = vst.msk [vmem:[#allocation2 + $0x40] sm:$0xff] %vm230, %v206
      %240 = vst.msk [vmem:[#allocation2 + $0x48] sm:$0xff] %vm230, %v207
      %241 = vst.msk [vmem:[#allocation2 + $0x50] sm:$0xff] %vm230, %v208
      %242 = vst.msk [vmem:[#allocation2 + $0x58] sm:$0xff] %vm230, %v209
      %243 = vst.msk [vmem:[#allocation2 + $0x60] sm:$0xff] %vm230, %v210
      %244 = vst.msk [vmem:[#allocation2 + $0x68] sm:$0xff] %vm230, %v211
      %245 = vst.msk [vmem:[#allocation2 + $0x70] sm:$0xff] %vm230, %v212
      %246 = vst.msk [vmem:[#allocation2 + $0x78] sm:$0xff] %vm230, %v213
      %247 = vst.msk [vmem:[#allocation2 + $0x80] sm:$0xff] %vm230, %v214
      %248 = vst.msk [vmem:[#allocation2 + $0x88] sm:$0xff] %vm230, %v215
      %249 = vst.msk [vmem:[#allocation2 + $0x90] sm:$0xff] %vm230, %v216
      %250 = vst.msk [vmem:[#allocation2 + $0x98] sm:$0xff] %vm230, %v217
      %251 = vst.msk [vmem:[#allocation2 + $0xa0] sm:$0xff] %vm230, %v218
      %252 = vst.msk [vmem:[#allocation2 + $0xa8] sm:$0xff] %vm230, %v219
      %253 = vst.msk [vmem:[#allocation2 + $0xb0] sm:$0xff] %vm230, %v220
      %254 = vst.msk [vmem:[#allocation2 + $0xb8] sm:$0xff] %vm230, %v221
      %255 = vst.msk [vmem:[#allocation2 + $0xc0] sm:$0xff] %vm230, %v222
      %256 = vst.msk [vmem:[#allocation2 + $0xc8] sm:$0xff] %vm230, %v223
      %257 = vst.msk [vmem:[#allocation2 + $0xd0] sm:$0xff] %vm230, %v224
      %258 = vst.msk [vmem:[#allocation2 + $0xd8] sm:$0xff] %vm230, %v225
      %259 = vst.msk [vmem:[#allocation2 + $0xe0] sm:$0xff] %vm230, %v226
      %260 = vst.msk [vmem:[#allocation2 + $0xe8] sm:$0xff] %vm230, %v227
      %261 = vst.msk [vmem:[#allocation2 + $0xf0] sm:$0xff] %vm230, %v228
      %262 = vst.msk [vmem:[#allocation2 + $0xf8] sm:$0xff] %vm230, %v229
      %v263 = vld [vmem:[%s192 + $0x1] sm:$0xff]
      %v264 = vld [vmem:[%s192 + $0x9] sm:$0xff]
      %v265 = vld [vmem:[%s192 + $0x11] sm:$0xff]
      %v266 = vld [vmem:[%s192 + $0x19] sm:$0xff]
      %v267 = vld [vmem:[%s192 + $0x21] sm:$0xff]
      %v268 = vld [vmem:[%s192 + $0x29] sm:$0xff]
      %v269 = vld [vmem:[%s192 + $0x31] sm:$0xff]
      %v270 = vld [vmem:[%s192 + $0x39] sm:$0xff]
      %v271 = vld [vmem:[%s192 + $0x41] sm:$0xff]
      %v272 = vld [vmem:[%s192 + $0x49] sm:$0xff]
      %v273 = vld [vmem:[%s192 + $0x51] sm:$0xff]
      %v274 = vld [vmem:[%s192 + $0x59] sm:$0xff]
      %v275 = vld [vmem:[%s192 + $0x61] sm:$0xff]
      %v276 = vld [vmem:[%s192 + $0x69] sm:$0xff]
      %v277 = vld [vmem:[%s192 + $0x71] sm:$0xff]
      %v278 = vld [vmem:[%s192 + $0x79] sm:$0xff]
      %v279 = vld [vmem:[%s192 + $0x81] sm:$0xff]
      %v280 = vld [vmem:[%s192 + $0x89] sm:$0xff]
      %v281 = vld [vmem:[%s192 + $0x91] sm:$0xff]
      %v282 = vld [vmem:[%s192 + $0x99] sm:$0xff]
      %v283 = vld [vmem:[%s192 + $0xa1] sm:$0xff]
      %v284 = vld [vmem:[%s192 + $0xa9] sm:$0xff]
      %v285 = vld [vmem:[%s192 + $0xb1] sm:$0xff]
      %v286 = vld [vmem:[%s192 + $0xb9] sm:$0xff]
      %v287 = vld [vmem:[%s192 + $0xc1] sm:$0xff]
      %v288 = vld [vmem:[%s192 + $0xc9] sm:$0xff]
      %v289 = vld [vmem:[%s192 + $0xd1] sm:$0xff]
      %v290 = vld [vmem:[%s192 + $0xd9] sm:$0xff]
      %v291 = vld [vmem:[%s192 + $0xe1] sm:$0xff]
      %v292 = vld [vmem:[%s192 + $0xe9] sm:$0xff]
      %v293 = vld [vmem:[%s192 + $0xf1] sm:$0xff]
      %v294 = vld [vmem:[%s192 + $0xf9] sm:$0xff]
      %327 = vrot.lane.b32.xlu0 %v263, 4
      %v328 = vpop.permute.xlu0 %327
      %329 = vrot.lane.b32.xlu0 %v264, 4
      %v330 = vpop.permute.xlu0 %329
      %331 = vrot.lane.b32.xlu0 %v265, 4
      %v332 = vpop.permute.xlu0 %331
      %333 = vrot.lane.b32.xlu0 %v266, 4
      %v334 = vpop.permute.xlu0 %333
      %335 = vrot.lane.b32.xlu0 %v267, 4
      %v336 = vpop.permute.xlu0 %335
      %337 = vrot.lane.b32.xlu0 %v268, 4
      %v338 = vpop.permute.xlu0 %337
      %339 = vrot.lane.b32.xlu0 %v269, 4
      %v340 = vpop.permute.xlu0 %339
      %341 = vrot.lane.b32.xlu0 %v270, 4
      %v342 = vpop.permute.xlu0 %341
      %343 = vrot.lane.b32.xlu0 %v271, 4
      %v344 = vpop.permute.xlu0 %343
      %345 = vrot.lane.b32.xlu0 %v272, 4
      %v346 = vpop.permute.xlu0 %345
      %347 = vrot.lane.b32.xlu0 %v273, 4
      %v348 = vpop.permute.xlu0 %347
      %349 = vrot.lane.b32.xlu0 %v274, 4
      %v350 = vpop.permute.xlu0 %349
      %351 = vrot.lane.b32.xlu0 %v275, 4
      %v352 = vpop.permute.xlu0 %351
      %353 = vrot.lane.b32.xlu0 %v276, 4
      %v354 = vpop.permute.xlu0 %353
      %355 = vrot.lane.b32.xlu0 %v277, 4
      %v356 = vpop.permute.xlu0 %355
      %357 = vrot.lane.b32.xlu0 %v278, 4
      %v358 = vpop.permute.xlu0 %357
      %359 = vrot.lane.b32.xlu0 %v279, 4
      %v360 = vpop.permute.xlu0 %359
      %361 = vrot.lane.b32.xlu0 %v280, 4
      %v362 = vpop.permute.xlu0 %361
      %363 = vrot.lane.b32.xlu0 %v281, 4
      %v364 = vpop.permute.xlu0 %363
      %365 = vrot.lane.b32.xlu0 %v282, 4
      %v366 = vpop.permute.xlu0 %365
      %367 = vrot.lane.b32.xlu0 %v283, 4
      %v368 = vpop.permute.xlu0 %367
      %369 = vrot.lane.b32.xlu0 %v284, 4
      %v370 = vpop.permute.xlu0 %369
      %371 = vrot.lane.b32.xlu0 %v285, 4
      %v372 = vpop.permute.xlu0 %371
      %373 = vrot.lane.b32.xlu0 %v286, 4
      %v374 = vpop.permute.xlu0 %373
      %375 = vrot.lane.b32.xlu0 %v287, 4
      %v376 = vpop.permute.xlu0 %375
      %377 = vrot.lane.b32.xlu0 %v288, 4
      %v378 = vpop.permute.xlu0 %377
      %379 = vrot.lane.b32.xlu0 %v289, 4
      %v380 = vpop.permute.xlu0 %379
      %381 = vrot.lane.b32.xlu0 %v290, 4
      %v382 = vpop.permute.xlu0 %381
      %383 = vrot.lane.b32.xlu0 %v291, 4
      %v384 = vpop.permute.xlu0 %383
      %385 = vrot.lane.b32.xlu0 %v292, 4
      %v386 = vpop.permute.xlu0 %385
      %387 = vrot.lane.b32.xlu0 %v293, 4
      %v388 = vpop.permute.xlu0 %387
      %389 = vrot.lane.b32.xlu0 %v294, 4
      %v390 = vpop.permute.xlu0 %389
      %vm423 = vcmask 64544
      %424 = vst.msk [vmem:[#allocation2] sm:$0xff] %vm423, %v328
      %425 = vst.msk [vmem:[#allocation2 + $0x8] sm:$0xff] %vm423, %v330
      %426 = vst.msk [vmem:[#allocation2 + $0x10] sm:$0xff] %vm423, %v332
      %427 = vst.msk [vmem:[#allocation2 + $0x18] sm:$0xff] %vm423, %v334
      %428 = vst.msk [vmem:[#allocation2 + $0x20] sm:$0xff] %vm423, %v336
      %429 = vst.msk [vmem:[#allocation2 + $0x28] sm:$0xff] %vm423, %v338
      %430 = vst.msk [vmem:[#allocation2 + $0x30] sm:$0xff] %vm423, %v340
      %431 = vst.msk [vmem:[#allocation2 + $0x38] sm:$0xff] %vm423, %v342
      %432 = vst.msk [vmem:[#allocation2 + $0x40] sm:$0xff] %vm423, %v344
      %433 = vst.msk [vmem:[#allocation2 + $0x48] sm:$0xff] %vm423, %v346
      %434 = vst.msk [vmem:[#allocation2 + $0x50] sm:$0xff] %vm423, %v348
      %435 = vst.msk [vmem:[#allocation2 + $0x58] sm:$0xff] %vm423, %v350
      %436 = vst.msk [vmem:[#allocation2 + $0x60] sm:$0xff] %vm423, %v352
      %437 = vst.msk [vmem:[#allocation2 + $0x68] sm:$0xff] %vm423, %v354
      %438 = vst.msk [vmem:[#allocation2 + $0x70] sm:$0xff] %vm423, %v356
      %439 = vst.msk [vmem:[#allocation2 + $0x78] sm:$0xff] %vm423, %v358
      %440 = vst.msk [vmem:[#allocation2 + $0x80] sm:$0xff] %vm423, %v360
      %441 = vst.msk [vmem:[#allocation2 + $0x88] sm:$0xff] %vm423, %v362
      %442 = vst.msk [vmem:[#allocation2 + $0x90] sm:$0xff] %vm423, %v364
      %443 = vst.msk [vmem:[#allocation2 + $0x98] sm:$0xff] %vm423, %v366
      %444 = vst.msk [vmem:[#allocation2 + $0xa0] sm:$0xff] %vm423, %v368
      %445 = vst.msk [vmem:[#allocation2 + $0xa8] sm:$0xff] %vm423, %v370
      %446 = vst.msk [vmem:[#allocation2 + $0xb0] sm:$0xff] %vm423, %v372
      %447 = vst.msk [vmem:[#allocation2 + $0xb8] sm:$0xff] %vm423, %v374
      %448 = vst.msk [vmem:[#allocation2 + $0xc0] sm:$0xff] %vm423, %v376
      %449 = vst.msk [vmem:[#allocation2 + $0xc8] sm:$0xff] %vm423, %v378
      %450 = vst.msk [vmem:[#allocation2 + $0xd0] sm:$0xff] %vm423, %v380
      %451 = vst.msk [vmem:[#allocation2 + $0xd8] sm:$0xff] %vm423, %v382
      %452 = vst.msk [vmem:[#allocation2 + $0xe0] sm:$0xff] %vm423, %v384
      %453 = vst.msk [vmem:[#allocation2 + $0xe8] sm:$0xff] %vm423, %v386
      %454 = vst.msk [vmem:[#allocation2 + $0xf0] sm:$0xff] %vm423, %v388
      %455 = vst.msk [vmem:[#allocation2 + $0xf8] sm:$0xff] %vm423, %v390
      %v456 = vld [vmem:[%s192 + $0x2] sm:$0xff]
      %v457 = vld [vmem:[%s192 + $0xa] sm:$0xff]
      %v458 = vld [vmem:[%s192 + $0x12] sm:$0xff]
      %v459 = vld [vmem:[%s192 + $0x1a] sm:$0xff]
      %v460 = vld [vmem:[%s192 + $0x22] sm:$0xff]
      %v461 = vld [vmem:[%s192 + $0x2a] sm:$0xff]
      %v462 = vld [vmem:[%s192 + $0x32] sm:$0xff]
      %v463 = vld [vmem:[%s192 + $0x3a] sm:$0xff]
      %v464 = vld [vmem:[%s192 + $0x42] sm:$0xff]
      %v465 = vld [vmem:[%s192 + $0x4a] sm:$0xff]
      %v466 = vld [vmem:[%s192 + $0x52] sm:$0xff]
      %v467 = vld [vmem:[%s192 + $0x5a] sm:$0xff]
      %v468 = vld [vmem:[%s192 + $0x62] sm:$0xff]
      %v469 = vld [vmem:[%s192 + $0x6a] sm:$0xff]
      %v470 = vld [vmem:[%s192 + $0x72] sm:$0xff]
      %v471 = vld [vmem:[%s192 + $0x7a] sm:$0xff]
      %v472 = vld [vmem:[%s192 + $0x82] sm:$0xff]
      %v473 = vld [vmem:[%s192 + $0x8a] sm:$0xff]
      %v474 = vld [vmem:[%s192 + $0x92] sm:$0xff]
      %v475 = vld [vmem:[%s192 + $0x9a] sm:$0xff]
      %v476 = vld [vmem:[%s192 + $0xa2] sm:$0xff]
      %v477 = vld [vmem:[%s192 + $0xaa] sm:$0xff]
      %v478 = vld [vmem:[%s192 + $0xb2] sm:$0xff]
      %v479 = vld [vmem:[%s192 + $0xba] sm:$0xff]
      %v480 = vld [vmem:[%s192 + $0xc2] sm:$0xff]
      %v481 = vld [vmem:[%s192 + $0xca] sm:$0xff]
      %v482 = vld [vmem:[%s192 + $0xd2] sm:$0xff]
      %v483 = vld [vmem:[%s192 + $0xda] sm:$0xff]
      %v484 = vld [vmem:[%s192 + $0xe2] sm:$0xff]
      %v485 = vld [vmem:[%s192 + $0xea] sm:$0xff]
      %v486 = vld [vmem:[%s192 + $0xf2] sm:$0xff]
      %v487 = vld [vmem:[%s192 + $0xfa] sm:$0xff]
      %520 = vrot.lane.b32.xlu0 %v456, 8
      %v521 = vpop.permute.xlu0 %520
      %522 = vrot.lane.b32.xlu0 %v457, 8
      %v523 = vpop.permute.xlu0 %522
      %524 = vrot.lane.b32.xlu0 %v458, 8
      %v525 = vpop.permute.xlu0 %524
      %526 = vrot.lane.b32.xlu0 %v459, 8
      %v527 = vpop.permute.xlu0 %526
      %528 = vrot.lane.b32.xlu0 %v460, 8
      %v529 = vpop.permute.xlu0 %528
      %530 = vrot.lane.b32.xlu0 %v461, 8
      %v531 = vpop.permute.xlu0 %530
      %532 = vrot.lane.b32.xlu0 %v462, 8
      %v533 = vpop.permute.xlu0 %532
      %534 = vrot.lane.b32.xlu0 %v463, 8
      %v535 = vpop.permute.xlu0 %534
      %536 = vrot.lane.b32.xlu0 %v464, 8
      %v537 = vpop.permute.xlu0 %536
      %538 = vrot.lane.b32.xlu0 %v465, 8
      %v539 = vpop.permute.xlu0 %538
      %540 = vrot.lane.b32.xlu0 %v466, 8
      %v541 = vpop.permute.xlu0 %540
      %542 = vrot.lane.b32.xlu0 %v467, 8
      %v543 = vpop.permute.xlu0 %542
      %544 = vrot.lane.b32.xlu0 %v468, 8
      %v545 = vpop.permute.xlu0 %544
      %546 = vrot.lane.b32.xlu0 %v469, 8
      %v547 = vpop.permute.xlu0 %546
      %548 = vrot.lane.b32.xlu0 %v470, 8
      %v549 = vpop.permute.xlu0 %548
      %550 = vrot.lane.b32.xlu0 %v471, 8
      %v551 = vpop.permute.xlu0 %550
      %552 = vrot.lane.b32.xlu0 %v472, 8
      %v553 = vpop.permute.xlu0 %552
      %554 = vrot.lane.b32.xlu0 %v473, 8
      %v555 = vpop.permute.xlu0 %554
      %556 = vrot.lane.b32.xlu0 %v474, 8
      %v557 = vpop.permute.xlu0 %556
      %558 = vrot.lane.b32.xlu0 %v475, 8
      %v559 = vpop.permute.xlu0 %558
      %560 = vrot.lane.b32.xlu0 %v476, 8
      %v561 = vpop.permute.xlu0 %560
      %562 = vrot.lane.b32.xlu0 %v477, 8
      %v563 = vpop.permute.xlu0 %562
      %564 = vrot.lane.b32.xlu0 %v478, 8
      %v565 = vpop.permute.xlu0 %564
      %566 = vrot.lane.b32.xlu0 %v479, 8
      %v567 = vpop.permute.xlu0 %566
      %568 = vrot.lane.b32.xlu0 %v480, 8
      %v569 = vpop.permute.xlu0 %568
      %570 = vrot.lane.b32.xlu0 %v481, 8
      %v571 = vpop.permute.xlu0 %570
      %572 = vrot.lane.b32.xlu0 %v482, 8
      %v573 = vpop.permute.xlu0 %572
      %574 = vrot.lane.b32.xlu0 %v483, 8
      %v575 = vpop.permute.xlu0 %574
      %576 = vrot.lane.b32.xlu0 %v484, 8
      %v577 = vpop.permute.xlu0 %576
      %578 = vrot.lane.b32.xlu0 %v485, 8
      %v579 = vpop.permute.xlu0 %578
      %580 = vrot.lane.b32.xlu0 %v486, 8
      %v581 = vpop.permute.xlu0 %580
      %582 = vrot.lane.b32.xlu0 %v487, 8
      %v583 = vpop.permute.xlu0 %582
      %vm616 = vcmask 97344
      %617 = vst.msk [vmem:[#allocation2] sm:$0xff] %vm616, %v521
      %618 = vst.msk [vmem:[#allocation2 + $0x8] sm:$0xff] %vm616, %v523
      %619 = vst.msk [vmem:[#allocation2 + $0x10] sm:$0xff] %vm616, %v525
      %620 = vst.msk [vmem:[#allocation2 + $0x18] sm:$0xff] %vm616, %v527
      %621 = vst.msk [vmem:[#allocation2 + $0x20] sm:$0xff] %vm616, %v529
      %622 = vst.msk [vmem:[#allocation2 + $0x28] sm:$0xff] %vm616, %v531
      %623 = vst.msk [vmem:[#allocation2 + $0x30] sm:$0xff] %vm616, %v533
      %624 = vst.msk [vmem:[#allocation2 + $0x38] sm:$0xff] %vm616, %v535
      %625 = vst.msk [vmem:[#allocation2 + $0x40] sm:$0xff] %vm616, %v537
      %626 = vst.msk [vmem:[#allocation2 + $0x48] sm:$0xff] %vm616, %v539
      %627 = vst.msk [vmem:[#allocation2 + $0x50] sm:$0xff] %vm616, %v541
      %628 = vst.msk [vmem:[#allocation2 + $0x58] sm:$0xff] %vm616, %v543
      %629 = vst.msk [vmem:[#allocation2 + $0x60] sm:$0xff] %vm616, %v545
      %630 = vst.msk [vmem:[#allocation2 + $0x68] sm:$0xff] %vm616, %v547
      %631 = vst.msk [vmem:[#allocation2 + $0x70] sm:$0xff] %vm616, %v549
      %632 = vst.msk [vmem:[#allocation2 + $0x78] sm:$0xff] %vm616, %v551
      %633 = vst.msk [vmem:[#allocation2 + $0x80] sm:$0xff] %vm616, %v553
      %634 = vst.msk [vmem:[#allocation2 + $0x88] sm:$0xff] %vm616, %v555
      %635 = vst.msk [vmem:[#allocation2 + $0x90] sm:$0xff] %vm616, %v557
      %636 = vst.msk [vmem:[#allocation2 + $0x98] sm:$0xff] %vm616, %v559
      %637 = vst.msk [vmem:[#allocation2 + $0xa0] sm:$0xff] %vm616, %v561
      %638 = vst.msk [vmem:[#allocation2 + $0xa8] sm:$0xff] %vm616, %v563
      %639 = vst.msk [vmem:[#allocation2 + $0xb0] sm:$0xff] %vm616, %v565
      %640 = vst.msk [vmem:[#allocation2 + $0xb8] sm:$0xff] %vm616, %v567
      %641 = vst.msk [vmem:[#allocation2 + $0xc0] sm:$0xff] %vm616, %v569
      %642 = vst.msk [vmem:[#allocation2 + $0xc8] sm:$0xff] %vm616, %v571
      %643 = vst.msk [vmem:[#allocation2 + $0xd0] sm:$0xff] %vm616, %v573
      %644 = vst.msk [vmem:[#allocation2 + $0xd8] sm:$0xff] %vm616, %v575
      %645 = vst.msk [vmem:[#allocation2 + $0xe0] sm:$0xff] %vm616, %v577
      %646 = vst.msk [vmem:[#allocation2 + $0xe8] sm:$0xff] %vm616, %v579
      %647 = vst.msk [vmem:[#allocation2 + $0xf0] sm:$0xff] %vm616, %v581
      %648 = vst.msk [vmem:[#allocation2 + $0xf8] sm:$0xff] %vm616, %v583
      %v649 = vld [vmem:[%s192 + $0x10] sm:$0xff]
      %v650 = vld [vmem:[%s192 + $0x18] sm:$0xff]
      %v651 = vld [vmem:[%s192 + $0x20] sm:$0xff]
      %v652 = vld [vmem:[%s192 + $0x28] sm:$0xff]
      %v653 = vld [vmem:[%s192 + $0x30] sm:$0xff]
      %v654 = vld [vmem:[%s192 + $0x38] sm:$0xff]
      %v655 = vld [vmem:[%s192 + $0x40] sm:$0xff]
      %v656 = vld [vmem:[%s192 + $0x48] sm:$0xff]
      %v657 = vld [vmem:[%s192 + $0x50] sm:$0xff]
      %v658 = vld [vmem:[%s192 + $0x58] sm:$0xff]
      %v659 = vld [vmem:[%s192 + $0x60] sm:$0xff]
      %v660 = vld [vmem:[%s192 + $0x68] sm:$0xff]
      %v661 = vld [vmem:[%s192 + $0x70] sm:$0xff]
      %v662 = vld [vmem:[%s192 + $0x78] sm:$0xff]
      %v663 = vld [vmem:[%s192 + $0x80] sm:$0xff]
      %v664 = vld [vmem:[%s192 + $0x88] sm:$0xff]
      %v665 = vld [vmem:[%s192 + $0x90] sm:$0xff]
      %v666 = vld [vmem:[%s192 + $0x98] sm:$0xff]
      %v667 = vld [vmem:[%s192 + $0xa0] sm:$0xff]
      %v668 = vld [vmem:[%s192 + $0xa8] sm:$0xff]
      %v669 = vld [vmem:[%s192 + $0xb0] sm:$0xff]
      %v670 = vld [vmem:[%s192 + $0xb8] sm:$0xff]
      %v671 = vld [vmem:[%s192 + $0xc0] sm:$0xff]
      %v672 = vld [vmem:[%s192 + $0xc8] sm:$0xff]
      %v673 = vld [vmem:[%s192 + $0xd0] sm:$0xff]
      %v674 = vld [vmem:[%s192 + $0xd8] sm:$0xff]
      %v675 = vld [vmem:[%s192 + $0xe0] sm:$0xff]
      %v676 = vld [vmem:[%s192 + $0xe8] sm:$0xff]
      %v677 = vld [vmem:[%s192 + $0xf0] sm:$0xff]
      %v678 = vld [vmem:[%s192 + $0xf8] sm:$0xff]
      %v679 = vld [vmem:[%s192 + $0x100] sm:$0xff]
      %v680 = vld [vmem:[%s192 + $0x108] sm:$0xff]
      %713 = vrot.lane.b32.xlu0 %v649, 12
      %v714 = vpop.permute.xlu0 %713
      %715 = vrot.lane.b32.xlu0 %v650, 12
      %v716 = vpop.permute.xlu0 %715
      %717 = vrot.lane.b32.xlu0 %v651, 12
      %v718 = vpop.permute.xlu0 %717
      %719 = vrot.lane.b32.xlu0 %v652, 12
      %v720 = vpop.permute.xlu0 %719
      %721 = vrot.lane.b32.xlu0 %v653, 12
      %v722 = vpop.permute.xlu0 %721
      %723 = vrot.lane.b32.xlu0 %v654, 12
      %v724 = vpop.permute.xlu0 %723
      %725 = vrot.lane.b32.xlu0 %v655, 12
      %v726 = vpop.permute.xlu0 %725
      %727 = vrot.lane.b32.xlu0 %v656, 12
      %v728 = vpop.permute.xlu0 %727
      %729 = vrot.lane.b32.xlu0 %v657, 12
      %v730 = vpop.permute.xlu0 %729
      %731 = vrot.lane.b32.xlu0 %v658, 12
      %v732 = vpop.permute.xlu0 %731
      %733 = vrot.lane.b32.xlu0 %v659, 12
      %v734 = vpop.permute.xlu0 %733
      %735 = vrot.lane.b32.xlu0 %v660, 12
      %v736 = vpop.permute.xlu0 %735
      %737 = vrot.lane.b32.xlu0 %v661, 12
      %v738 = vpop.permute.xlu0 %737
      %739 = vrot.lane.b32.xlu0 %v662, 12
      %v740 = vpop.permute.xlu0 %739
      %741 = vrot.lane.b32.xlu0 %v663, 12
      %v742 = vpop.permute.xlu0 %741
      %743 = vrot.lane.b32.xlu0 %v664, 12
      %v744 = vpop.permute.xlu0 %743
      %745 = vrot.lane.b32.xlu0 %v665, 12
      %v746 = vpop.permute.xlu0 %745
      %747 = vrot.lane.b32.xlu0 %v666, 12
      %v748 = vpop.permute.xlu0 %747
      %749 = vrot.lane.b32.xlu0 %v667, 12
      %v750 = vpop.permute.xlu0 %749
      %751 = vrot.lane.b32.xlu0 %v668, 12
      %v752 = vpop.permute.xlu0 %751
      %753 = vrot.lane.b32.xlu0 %v669, 12
      %v754 = vpop.permute.xlu0 %753
      %755 = vrot.lane.b32.xlu0 %v670, 12
      %v756 = vpop.permute.xlu0 %755
      %757 = vrot.lane.b32.xlu0 %v671, 12
      %v758 = vpop.permute.xlu0 %757
      %759 = vrot.lane.b32.xlu0 %v672, 12
      %v760 = vpop.permute.xlu0 %759
      %761 = vrot.lane.b32.xlu0 %v673, 12
      %v762 = vpop.permute.xlu0 %761
      %763 = vrot.lane.b32.xlu0 %v674, 12
      %v764 = vpop.permute.xlu0 %763
      %765 = vrot.lane.b32.xlu0 %v675, 12
      %v766 = vpop.permute.xlu0 %765
      %767 = vrot.lane.b32.xlu0 %v676, 12
      %v768 = vpop.permute.xlu0 %767
      %769 = vrot.lane.b32.xlu0 %v677, 12
      %v770 = vpop.permute.xlu0 %769
      %771 = vrot.lane.b32.xlu0 %v678, 12
      %v772 = vpop.permute.xlu0 %771
      %773 = vrot.lane.b32.xlu0 %v679, 12
      %v774 = vpop.permute.xlu0 %773
      %775 = vrot.lane.b32.xlu0 %v680, 12
      %v776 = vpop.permute.xlu0 %775
      %vm809 = vcmask 130144
      %810 = vst.msk [vmem:[#allocation2] sm:$0xff] %vm809, %v714
      %811 = vst.msk [vmem:[#allocation2 + $0x8] sm:$0xff] %vm809, %v716
      %812 = vst.msk [vmem:[#allocation2 + $0x10] sm:$0xff] %vm809, %v718
      %813 = vst.msk [vmem:[#allocation2 + $0x18] sm:$0xff] %vm809, %v720
      %814 = vst.msk [vmem:[#allocation2 + $0x20] sm:$0xff] %vm809, %v722
      %815 = vst.msk [vmem:[#allocation2 + $0x28] sm:$0xff] %vm809, %v724
      %816 = vst.msk [vmem:[#allocation2 + $0x30] sm:$0xff] %vm809, %v726
      %817 = vst.msk [vmem:[#allocation2 + $0x38] sm:$0xff] %vm809, %v728
      %818 = vst.msk [vmem:[#allocation2 + $0x40] sm:$0xff] %vm809, %v730
      %819 = vst.msk [vmem:[#allocation2 + $0x48] sm:$0xff] %vm809, %v732
      %820 = vst.msk [vmem:[#allocation2 + $0x50] sm:$0xff] %vm809, %v734
      %821 = vst.msk [vmem:[#allocation2 + $0x58] sm:$0xff] %vm809, %v736
      %822 = vst.msk [vmem:[#allocation2 + $0x60] sm:$0xff] %vm809, %v738
      %823 = vst.msk [vmem:[#allocation2 + $0x68] sm:$0xff] %vm809, %v740
      %824 = vst.msk [vmem:[#allocation2 + $0x70] sm:$0xff] %vm809, %v742
      %825 = vst.msk [vmem:[#allocation2 + $0x78] sm:$0xff] %vm809, %v744
      %826 = vst.msk [vmem:[#allocation2 + $0x80] sm:$0xff] %vm809, %v746
      %827 = vst.msk [vmem:[#allocation2 + $0x88] sm:$0xff] %vm809, %v748
      %828 = vst.msk [vmem:[#allocation2 + $0x90] sm:$0xff] %vm809, %v750
      %829 = vst.msk [vmem:[#allocation2 + $0x98] sm:$0xff] %vm809, %v752
      %830 = vst.msk [vmem:[#allocation2 + $0xa0] sm:$0xff] %vm809, %v754
      %831 = vst.msk [vmem:[#allocation2 + $0xa8] sm:$0xff] %vm809, %v756
      %832 = vst.msk [vmem:[#allocation2 + $0xb0] sm:$0xff] %vm809, %v758
      %833 = vst.msk [vmem:[#allocation2 + $0xb8] sm:$0xff] %vm809, %v760
      %834 = vst.msk [vmem:[#allocation2 + $0xc0] sm:$0xff] %vm809, %v762
      %835 = vst.msk [vmem:[#allocation2 + $0xc8] sm:$0xff] %vm809, %v764
      %836 = vst.msk [vmem:[#allocation2 + $0xd0] sm:$0xff] %vm809, %v766
      %837 = vst.msk [vmem:[#allocation2 + $0xd8] sm:$0xff] %vm809, %v768
      %838 = vst.msk [vmem:[#allocation2 + $0xe0] sm:$0xff] %vm809, %v770
      %839 = vst.msk [vmem:[#allocation2 + $0xe8] sm:$0xff] %vm809, %v772
      %840 = vst.msk [vmem:[#allocation2 + $0xf0] sm:$0xff] %vm809, %v774
      %841 = vst.msk [vmem:[#allocation2 + $0xf8] sm:$0xff] %vm809, %v776
      %v842 = vld [vmem:[%s192 + $0x11] sm:$0xff]
      %v843 = vld [vmem:[%s192 + $0x19] sm:$0xff]
      %v844 = vld [vmem:[%s192 + $0x21] sm:$0xff]
      %v845 = vld [vmem:[%s192 + $0x29] sm:$0xff]
      %v846 = vld [vmem:[%s192 + $0x31] sm:$0xff]
      %v847 = vld [vmem:[%s192 + $0x39] sm:$0xff]
      %v848 = vld [vmem:[%s192 + $0x41] sm:$0xff]
      %v849 = vld [vmem:[%s192 + $0x49] sm:$0xff]
      %v850 = vld [vmem:[%s192 + $0x51] sm:$0xff]
      %v851 = vld [vmem:[%s192 + $0x59] sm:$0xff]
      %v852 = vld [vmem:[%s192 + $0x61] sm:$0xff]
      %v853 = vld [vmem:[%s192 + $0x69] sm:$0xff]
      %v854 = vld [vmem:[%s192 + $0x71] sm:$0xff]
      %v855 = vld [vmem:[%s192 + $0x79] sm:$0xff]
      %v856 = vld [vmem:[%s192 + $0x81] sm:$0xff]
      %v857 = vld [vmem:[%s192 + $0x89] sm:$0xff]
      %v858 = vld [vmem:[%s192 + $0x91] sm:$0xff]
      %v859 = vld [vmem:[%s192 + $0x99] sm:$0xff]
      %v860 = vld [vmem:[%s192 + $0xa1] sm:$0xff]
      %v861 = vld [vmem:[%s192 + $0xa9] sm:$0xff]
      %v862 = vld [vmem:[%s192 + $0xb1] sm:$0xff]
      %v863 = vld [vmem:[%s192 + $0xb9] sm:$0xff]
      %v864 = vld [vmem:[%s192 + $0xc1] sm:$0xff]
      %v865 = vld [vmem:[%s192 + $0xc9] sm:$0xff]
      %v866 = vld [vmem:[%s192 + $0xd1] sm:$0xff]
      %v867 = vld [vmem:[%s192 + $0xd9] sm:$0xff]
      %v868 = vld [vmem:[%s192 + $0xe1] sm:$0xff]
      %v869 = vld [vmem:[%s192 + $0xe9] sm:$0xff]
      %v870 = vld [vmem:[%s192 + $0xf1] sm:$0xff]
      %v871 = vld [vmem:[%s192 + $0xf9] sm:$0xff]
      %v872 = vld [vmem:[%s192 + $0x101] sm:$0xff]
      %v873 = vld [vmem:[%s192 + $0x109] sm:$0xff]
      %906 = vrot.lane.b32.xlu0 %v842, 16
      %v907 = vpop.permute.xlu0 %906
      %908 = vrot.lane.b32.xlu0 %v843, 16
      %v909 = vpop.permute.xlu0 %908
      %910 = vrot.lane.b32.xlu0 %v844, 16
      %v911 = vpop.permute.xlu0 %910
      %912 = vrot.lane.b32.xlu0 %v845, 16
      %v913 = vpop.permute.xlu0 %912
      %914 = vrot.lane.b32.xlu0 %v846, 16
      %v915 = vpop.permute.xlu0 %914
      %916 = vrot.lane.b32.xlu0 %v847, 16
      %v917 = vpop.permute.xlu0 %916
      %918 = vrot.lane.b32.xlu0 %v848, 16
      %v919 = vpop.permute.xlu0 %918
      %920 = vrot.lane.b32.xlu0 %v849, 16
      %v921 = vpop.permute.xlu0 %920
      %922 = vrot.lane.b32.xlu0 %v850, 16
      %v923 = vpop.permute.xlu0 %922
      %924 = vrot.lane.b32.xlu0 %v851, 16
      %v925 = vpop.permute.xlu0 %924
      %926 = vrot.lane.b32.xlu0 %v852, 16
      %v927 = vpop.permute.xlu0 %926
      %928 = vrot.lane.b32.xlu0 %v853, 16
      %v929 = vpop.permute.xlu0 %928
      %930 = vrot.lane.b32.xlu0 %v854, 16
      %v931 = vpop.permute.xlu0 %930
      %932 = vrot.lane.b32.xlu0 %v855, 16
      %v933 = vpop.permute.xlu0 %932
      %934 = vrot.lane.b32.xlu0 %v856, 16
      %v935 = vpop.permute.xlu0 %934
      %936 = vrot.lane.b32.xlu0 %v857, 16
      %v937 = vpop.permute.xlu0 %936
      %938 = vrot.lane.b32.xlu0 %v858, 16
      %v939 = vpop.permute.xlu0 %938
      %940 = vrot.lane.b32.xlu0 %v859, 16
      %v941 = vpop.permute.xlu0 %940
      %942 = vrot.lane.b32.xlu0 %v860, 16
      %v943 = vpop.permute.xlu0 %942
      %944 = vrot.lane.b32.xlu0 %v861, 16
      %v945 = vpop.permute.xlu0 %944
      %946 = vrot.lane.b32.xlu0 %v862, 16
      %v947 = vpop.permute.xlu0 %946
      %948 = vrot.lane.b32.xlu0 %v863, 16
      %v949 = vpop.permute.xlu0 %948
      %950 = vrot.lane.b32.xlu0 %v864, 16
      %v951 = vpop.permute.xlu0 %950
      %952 = vrot.lane.b32.xlu0 %v865, 16
      %v953 = vpop.permute.xlu0 %952
      %954 = vrot.lane.b32.xlu0 %v866, 16
      %v955 = vpop.permute.xlu0 %954
      %956 = vrot.lane.b32.xlu0 %v867, 16
      %v957 = vpop.permute.xlu0 %956
      %958 = vrot.lane.b32.xlu0 %v868, 16
      %v959 = vpop.permute.xlu0 %958
      %960 = vrot.lane.b32.xlu0 %v869, 16
      %v961 = vpop.permute.xlu0 %960
      %962 = vrot.lane.b32.xlu0 %v870, 16
      %v963 = vpop.permute.xlu0 %962
      %964 = vrot.lane.b32.xlu0 %v871, 16
      %v965 = vpop.permute.xlu0 %964
      %966 = vrot.lane.b32.xlu0 %v872, 16
      %v967 = vpop.permute.xlu0 %966
      %968 = vrot.lane.b32.xlu0 %v873, 16
      %v969 = vpop.permute.xlu0 %968
      %vm1002 = vcmask 162944
      %1003 = vst.msk [vmem:[#allocation2] sm:$0xff] %vm1002, %v907
      %1004 = vst.msk [vmem:[#allocation2 + $0x8] sm:$0xff] %vm1002, %v909
      %1005 = vst.msk [vmem:[#allocation2 + $0x10] sm:$0xff] %vm1002, %v911
      %1006 = vst.msk [vmem:[#allocation2 + $0x18] sm:$0xff] %vm1002, %v913
      %1007 = vst.msk [vmem:[#allocation2 + $0x20] sm:$0xff] %vm1002, %v915
      %1008 = vst.msk [vmem:[#allocation2 + $0x28] sm:$0xff] %vm1002, %v917
      %1009 = vst.msk [vmem:[#allocation2 + $0x30] sm:$0xff] %vm1002, %v919
      %1010 = vst.msk [vmem:[#allocation2 + $0x38] sm:$0xff] %vm1002, %v921
      %1011 = vst.msk [vmem:[#allocation2 + $0x40] sm:$0xff] %vm1002, %v923
      %1012 = vst.msk [vmem:[#allocation2 + $0x48] sm:$0xff] %vm1002, %v925
      %1013 = vst.msk [vmem:[#allocation2 + $0x50] sm:$0xff] %vm1002, %v927
      %1014 = vst.msk [vmem:[#allocation2 + $0x58] sm:$0xff] %vm1002, %v929
      %1015 = vst.msk [vmem:[#allocation2 + $0x60] sm:$0xff] %vm1002, %v931
      %1016 = vst.msk [vmem:[#allocation2 + $0x68] sm:$0xff] %vm1002, %v933
      %1017 = vst.msk [vmem:[#allocation2 + $0x70] sm:$0xff] %vm1002, %v935
      %1018 = vst.msk [vmem:[#allocation2 + $0x78] sm:$0xff] %vm1002, %v937
      %1019 = vst.msk [vmem:[#allocation2 + $0x80] sm:$0xff] %vm1002, %v939
      %1020 = vst.msk [vmem:[#allocation2 + $0x88] sm:$0xff] %vm1002, %v941
      %1021 = vst.msk [vmem:[#allocation2 + $0x90] sm:$0xff] %vm1002, %v943
      %1022 = vst.msk [vmem:[#allocation2 + $0x98] sm:$0xff] %vm1002, %v945
      %1023 = vst.msk [vmem:[#allocation2 + $0xa0] sm:$0xff] %vm1002, %v947
      %1024 = vst.msk [vmem:[#allocation2 + $0xa8] sm:$0xff] %vm1002, %v949
      %1025 = vst.msk [vmem:[#allocation2 + $0xb0] sm:$0xff] %vm1002, %v951
      %1026 = vst.msk [vmem:[#allocation2 + $0xb8] sm:$0xff] %vm1002, %v953
      %1027 = vst.msk [vmem:[#allocation2 + $0xc0] sm:$0xff] %vm1002, %v955
      %1028 = vst.msk [vmem:[#allocation2 + $0xc8] sm:$0xff] %vm1002, %v957
      %1029 = vst.msk [vmem:[#allocation2 + $0xd0] sm:$0xff] %vm1002, %v959
      %1030 = vst.msk [vmem:[#allocation2 + $0xd8] sm:$0xff] %vm1002, %v961
      %1031 = vst.msk [vmem:[#allocation2 + $0xe0] sm:$0xff] %vm1002, %v963
      %1032 = vst.msk [vmem:[#allocation2 + $0xe8] sm:$0xff] %vm1002, %v965
      %1033 = vst.msk [vmem:[#allocation2 + $0xf0] sm:$0xff] %vm1002, %v967
      %1034 = vst.msk [vmem:[#allocation2 + $0xf8] sm:$0xff] %vm1002, %v969
      %v1035 = vld [vmem:[%s192 + $0x12] sm:$0xff]
      %v1036 = vld [vmem:[%s192 + $0x1a] sm:$0xff]
      %v1037 = vld [vmem:[%s192 + $0x22] sm:$0xff]
      %v1038 = vld [vmem:[%s192 + $0x2a] sm:$0xff]
      %v1039 = vld [vmem:[%s192 + $0x32] sm:$0xff]
      %v1040 = vld [vmem:[%s192 + $0x3a] sm:$0xff]
      %v1041 = vld [vmem:[%s192 + $0x42] sm:$0xff]
      %v1042 = vld [vmem:[%s192 + $0x4a] sm:$0xff]
      %v1043 = vld [vmem:[%s192 + $0x52] sm:$0xff]
      %v1044 = vld [vmem:[%s192 + $0x5a] sm:$0xff]
      %v1045 = vld [vmem:[%s192 + $0x62] sm:$0xff]
      %v1046 = vld [vmem:[%s192 + $0x6a] sm:$0xff]
      %v1047 = vld [vmem:[%s192 + $0x72] sm:$0xff]
      %v1048 = vld [vmem:[%s192 + $0x7a] sm:$0xff]
      %v1049 = vld [vmem:[%s192 + $0x82] sm:$0xff]
      %v1050 = vld [vmem:[%s192 + $0x8a] sm:$0xff]
      %v1051 = vld [vmem:[%s192 + $0x92] sm:$0xff]
      %v1052 = vld [vmem:[%s192 + $0x9a] sm:$0xff]
      %v1053 = vld [vmem:[%s192 + $0xa2] sm:$0xff]
      %v1054 = vld [vmem:[%s192 + $0xaa] sm:$0xff]
      %v1055 = vld [vmem:[%s192 + $0xb2] sm:$0xff]
      %v1056 = vld [vmem:[%s192 + $0xba] sm:$0xff]
      %v1057 = vld [vmem:[%s192 + $0xc2] sm:$0xff]
      %v1058 = vld [vmem:[%s192 + $0xca] sm:$0xff]
      %v1059 = vld [vmem:[%s192 + $0xd2] sm:$0xff]
      %v1060 = vld [vmem:[%s192 + $0xda] sm:$0xff]
      %v1061 = vld [vmem:[%s192 + $0xe2] sm:$0xff]
      %v1062 = vld [vmem:[%s192 + $0xea] sm:$0xff]
      %v1063 = vld [vmem:[%s192 + $0xf2] sm:$0xff]
      %v1064 = vld [vmem:[%s192 + $0xfa] sm:$0xff]
      %v1065 = vld [vmem:[%s192 + $0x102] sm:$0xff]
      %v1066 = vld [vmem:[%s192 + $0x10a] sm:$0xff]
      %1099 = vrot.lane.b32.xlu0 %v1035, 20
      %v1100 = vpop.permute.xlu0 %1099
      %1101 = vrot.lane.b32.xlu0 %v1036, 20
      %v1102 = vpop.permute.xlu0 %1101
      %1103 = vrot.lane.b32.xlu0 %v1037, 20
      %v1104 = vpop.permute.xlu0 %1103
      %1105 = vrot.lane.b32.xlu0 %v1038, 20
      %v1106 = vpop.permute.xlu0 %1105
      %1107 = vrot.lane.b32.xlu0 %v1039, 20
      %v1108 = vpop.permute.xlu0 %1107
      %1109 = vrot.lane.b32.xlu0 %v1040, 20
      %v1110 = vpop.permute.xlu0 %1109
      %1111 = vrot.lane.b32.xlu0 %v1041, 20
      %v1112 = vpop.permute.xlu0 %1111
      %1113 = vrot.lane.b32.xlu0 %v1042, 20
      %v1114 = vpop.permute.xlu0 %1113
      %1115 = vrot.lane.b32.xlu0 %v1043, 20
      %v1116 = vpop.permute.xlu0 %1115
      %1117 = vrot.lane.b32.xlu0 %v1044, 20
      %v1118 = vpop.permute.xlu0 %1117
      %1119 = vrot.lane.b32.xlu0 %v1045, 20
      %v1120 = vpop.permute.xlu0 %1119
      %1121 = vrot.lane.b32.xlu0 %v1046, 20
      %v1122 = vpop.permute.xlu0 %1121
      %1123 = vrot.lane.b32.xlu0 %v1047, 20
      %v1124 = vpop.permute.xlu0 %1123
      %1125 = vrot.lane.b32.xlu0 %v1048, 20
      %v1126 = vpop.permute.xlu0 %1125
      %1127 = vrot.lane.b32.xlu0 %v1049, 20
      %v1128 = vpop.permute.xlu0 %1127
      %1129 = vrot.lane.b32.xlu0 %v1050, 20
      %v1130 = vpop.permute.xlu0 %1129
      %1131 = vrot.lane.b32.xlu0 %v1051, 20
      %v1132 = vpop.permute.xlu0 %1131
      %1133 = vrot.lane.b32.xlu0 %v1052, 20
      %v1134 = vpop.permute.xlu0 %1133
      %1135 = vrot.lane.b32.xlu0 %v1053, 20
      %v1136 = vpop.permute.xlu0 %1135
      %1137 = vrot.lane.b32.xlu0 %v1054, 20
      %v1138 = vpop.permute.xlu0 %1137
      %1139 = vrot.lane.b32.xlu0 %v1055, 20
      %v1140 = vpop.permute.xlu0 %1139
      %1141 = vrot.lane.b32.xlu0 %v1056, 20
      %v1142 = vpop.permute.xlu0 %1141
      %1143 = vrot.lane.b32.xlu0 %v1057, 20
      %v1144 = vpop.permute.xlu0 %1143
      %1145 = vrot.lane.b32.xlu0 %v1058, 20
      %v1146 = vpop.permute.xlu0 %1145
      %1147 = vrot.lane.b32.xlu0 %v1059, 20
      %v1148 = vpop.permute.xlu0 %1147
      %1149 = vrot.lane.b32.xlu0 %v1060, 20
      %v1150 = vpop.permute.xlu0 %1149
      %1151 = vrot.lane.b32.xlu0 %v1061, 20
      %v1152 = vpop.permute.xlu0 %1151
      %1153 = vrot.lane.b32.xlu0 %v1062, 20
      %v1154 = vpop.permute.xlu0 %1153
      %1155 = vrot.lane.b32.xlu0 %v1063, 20
      %v1156 = vpop.permute.xlu0 %1155
      %1157 = vrot.lane.b32.xlu0 %v1064, 20
      %v1158 = vpop.permute.xlu0 %1157
      %1159 = vrot.lane.b32.xlu0 %v1065, 20
      %v1160 = vpop.permute.xlu0 %1159
      %1161 = vrot.lane.b32.xlu0 %v1066, 20
      %v1162 = vpop.permute.xlu0 %1161
      %vm1195 = vcmask 195744
      %1196 = vst.msk [vmem:[#allocation2] sm:$0xff] %vm1195, %v1100
      %1197 = vst.msk [vmem:[#allocation2 + $0x8] sm:$0xff] %vm1195, %v1102
      %1198 = vst.msk [vmem:[#allocation2 + $0x10] sm:$0xff] %vm1195, %v1104
      %1199 = vst.msk [vmem:[#allocation2 + $0x18] sm:$0xff] %vm1195, %v1106
      %1200 = vst.msk [vmem:[#allocation2 + $0x20] sm:$0xff] %vm1195, %v1108
      %1201 = vst.msk [vmem:[#allocation2 + $0x28] sm:$0xff] %vm1195, %v1110
      %1202 = vst.msk [vmem:[#allocation2 + $0x30] sm:$0xff] %vm1195, %v1112
      %1203 = vst.msk [vmem:[#allocation2 + $0x38] sm:$0xff] %vm1195, %v1114
      %1204 = vst.msk [vmem:[#allocation2 + $0x40] sm:$0xff] %vm1195, %v1116
      %1205 = vst.msk [vmem:[#allocation2 + $0x48] sm:$0xff] %vm1195, %v1118
      %1206 = vst.msk [vmem:[#allocation2 + $0x50] sm:$0xff] %vm1195, %v1120
      %1207 = vst.msk [vmem:[#allocation2 + $0x58] sm:$0xff] %vm1195, %v1122
      %1208 = vst.msk [vmem:[#allocation2 + $0x60] sm:$0xff] %vm1195, %v1124
      %1209 = vst.msk [vmem:[#allocation2 + $0x68] sm:$0xff] %vm1195, %v1126
      %1210 = vst.msk [vmem:[#allocation2 + $0x70] sm:$0xff] %vm1195, %v1128
      %1211 = vst.msk [vmem:[#allocation2 + $0x78] sm:$0xff] %vm1195, %v1130
      %1212 = vst.msk [vmem:[#allocation2 + $0x80] sm:$0xff] %vm1195, %v1132
      %1213 = vst.msk [vmem:[#allocation2 + $0x88] sm:$0xff] %vm1195, %v1134
      %1214 = vst.msk [vmem:[#allocation2 + $0x90] sm:$0xff] %vm1195, %v1136
      %1215 = vst.msk [vmem:[#allocation2 + $0x98] sm:$0xff] %vm1195, %v1138
      %1216 = vst.msk [vmem:[#allocation2 + $0xa0] sm:$0xff] %vm1195, %v1140
      %1217 = vst.msk [vmem:[#allocation2 + $0xa8] sm:$0xff] %vm1195, %v1142
      %1218 = vst.msk [vmem:[#allocation2 + $0xb0] sm:$0xff] %vm1195, %v1144
      %1219 = vst.msk [vmem:[#allocation2 + $0xb8] sm:$0xff] %vm1195, %v1146
      %1220 = vst.msk [vmem:[#allocation2 + $0xc0] sm:$0xff] %vm1195, %v1148
      %1221 = vst.msk [vmem:[#allocation2 + $0xc8] sm:$0xff] %vm1195, %v1150
      %1222 = vst.msk [vmem:[#allocation2 + $0xd0] sm:$0xff] %vm1195, %v1152
      %1223 = vst.msk [vmem:[#allocation2 + $0xd8] sm:$0xff] %vm1195, %v1154
      %1224 = vst.msk [vmem:[#allocation2 + $0xe0] sm:$0xff] %vm1195, %v1156
      %1225 = vst.msk [vmem:[#allocation2 + $0xe8] sm:$0xff] %vm1195, %v1158
      %1226 = vst.msk [vmem:[#allocation2 + $0xf0] sm:$0xff] %vm1195, %v1160
      %1227 = vst.msk [vmem:[#allocation2 + $0xf8] sm:$0xff] %vm1195, %v1162
      %v1228 = vld [vmem:[%s192 + $0x20] sm:$0xff]
      %v1229 = vld [vmem:[%s192 + $0x28] sm:$0xff]
      %v1230 = vld [vmem:[%s192 + $0x30] sm:$0xff]
      %v1231 = vld [vmem:[%s192 + $0x38] sm:$0xff]
      %v1232 = vld [vmem:[%s192 + $0x40] sm:$0xff]
      %v1233 = vld [vmem:[%s192 + $0x48] sm:$0xff]
      %v1234 = vld [vmem:[%s192 + $0x50] sm:$0xff]
      %v1235 = vld [vmem:[%s192 + $0x58] sm:$0xff]
      %v1236 = vld [vmem:[%s192 + $0x60] sm:$0xff]
      %v1237 = vld [vmem:[%s192 + $0x68] sm:$0xff]
      %v1238 = vld [vmem:[%s192 + $0x70] sm:$0xff]
      %v1239 = vld [vmem:[%s192 + $0x78] sm:$0xff]
      %v1240 = vld [vmem:[%s192 + $0x80] sm:$0xff]
      %v1241 = vld [vmem:[%s192 + $0x88] sm:$0xff]
      %v1242 = vld [vmem:[%s192 + $0x90] sm:$0xff]
      %v1243 = vld [vmem:[%s192 + $0x98] sm:$0xff]
      %v1244 = vld [vmem:[%s192 + $0xa0] sm:$0xff]
      %v1245 = vld [vmem:[%s192 + $0xa8] sm:$0xff]
      %v1246 = vld [vmem:[%s192 + $0xb0] sm:$0xff]
      %v1247 = vld [vmem:[%s192 + $0xb8] sm:$0xff]
      %v1248 = vld [vmem:[%s192 + $0xc0] sm:$0xff]
      %v1249 = vld [vmem:[%s192 + $0xc8] sm:$0xff]
      %v1250 = vld [vmem:[%s192 + $0xd0] sm:$0xff]
      %v1251 = vld [vmem:[%s192 + $0xd8] sm:$0xff]
      %v1252 = vld [vmem:[%s192 + $0xe0] sm:$0xff]
      %v1253 = vld [vmem:[%s192 + $0xe8] sm:$0xff]
      %v1254 = vld [vmem:[%s192 + $0xf0] sm:$0xff]
      %v1255 = vld [vmem:[%s192 + $0xf8] sm:$0xff]
      %v1256 = vld [vmem:[%s192 + $0x100] sm:$0xff]
      %v1257 = vld [vmem:[%s192 + $0x108] sm:$0xff]
      %v1258 = vld [vmem:[%s192 + $0x110] sm:$0xff]
      %v1259 = vld [vmem:[%s192 + $0x118] sm:$0xff]
      %1292 = vrot.lane.b32.xlu0 %v1228, 24
      %v1293 = vpop.permute.xlu0 %1292
      %1294 = vrot.lane.b32.xlu0 %v1229, 24
      %v1295 = vpop.permute.xlu0 %1294
      %1296 = vrot.lane.b32.xlu0 %v1230, 24
      %v1297 = vpop.permute.xlu0 %1296
      %1298 = vrot.lane.b32.xlu0 %v1231, 24
      %v1299 = vpop.permute.xlu0 %1298
      %1300 = vrot.lane.b32.xlu0 %v1232, 24
      %v1301 = vpop.permute.xlu0 %1300
      %1302 = vrot.lane.b32.xlu0 %v1233, 24
      %v1303 = vpop.permute.xlu0 %1302
      %1304 = vrot.lane.b32.xlu0 %v1234, 24
      %v1305 = vpop.permute.xlu0 %1304
      %1306 = vrot.lane.b32.xlu0 %v1235, 24
      %v1307 = vpop.permute.xlu0 %1306
      %1308 = vrot.lane.b32.xlu0 %v1236, 24
      %v1309 = vpop.permute.xlu0 %1308
      %1310 = vrot.lane.b32.xlu0 %v1237, 24
      %v1311 = vpop.permute.xlu0 %1310
      %1312 = vrot.lane.b32.xlu0 %v1238, 24
      %v1313 = vpop.permute.xlu0 %1312
      %1314 = vrot.lane.b32.xlu0 %v1239, 24
      %v1315 = vpop.permute.xlu0 %1314
      %1316 = vrot.lane.b32.xlu0 %v1240, 24
      %v1317 = vpop.permute.xlu0 %1316
      %1318 = vrot.lane.b32.xlu0 %v1241, 24
      %v1319 = vpop.permute.xlu0 %1318
      %1320 = vrot.lane.b32.xlu0 %v1242, 24
      %v1321 = vpop.permute.xlu0 %1320
      %1322 = vrot.lane.b32.xlu0 %v1243, 24
      %v1323 = vpop.permute.xlu0 %1322
      %1324 = vrot.lane.b32.xlu0 %v1244, 24
      %v1325 = vpop.permute.xlu0 %1324
      %1326 = vrot.lane.b32.xlu0 %v1245, 24
      %v1327 = vpop.permute.xlu0 %1326
      %1328 = vrot.lane.b32.xlu0 %v1246, 24
      %v1329 = vpop.permute.xlu0 %1328
      %1330 = vrot.lane.b32.xlu0 %v1247, 24
      %v1331 = vpop.permute.xlu0 %1330
      %1332 = vrot.lane.b32.xlu0 %v1248, 24
      %v1333 = vpop.permute.xlu0 %1332
      %1334 = vrot.lane.b32.xlu0 %v1249, 24
      %v1335 = vpop.permute.xlu0 %1334
      %1336 = vrot.lane.b32.xlu0 %v1250, 24
      %v1337 = vpop.permute.xlu0 %1336
      %1338 = vrot.lane.b32.xlu0 %v1251, 24
      %v1339 = vpop.permute.xlu0 %1338
      %1340 = vrot.lane.b32.xlu0 %v1252, 24
      %v1341 = vpop.permute.xlu0 %1340
      %1342 = vrot.lane.b32.xlu0 %v1253, 24
      %v1343 = vpop.permute.xlu0 %1342
      %1344 = vrot.lane.b32.xlu0 %v1254, 24
      %v1345 = vpop.permute.xlu0 %1344
      %1346 = vrot.lane.b32.xlu0 %v1255, 24
      %v1347 = vpop.permute.xlu0 %1346
      %1348 = vrot.lane.b32.xlu0 %v1256, 24
      %v1349 = vpop.permute.xlu0 %1348
      %1350 = vrot.lane.b32.xlu0 %v1257, 24
      %v1351 = vpop.permute.xlu0 %1350
      %1352 = vrot.lane.b32.xlu0 %v1258, 24
      %v1353 = vpop.permute.xlu0 %1352
      %1354 = vrot.lane.b32.xlu0 %v1259, 24
      %v1355 = vpop.permute.xlu0 %1354
      %vm1388 = vcmask 228544
      %1389 = vst.msk [vmem:[#allocation2] sm:$0xff] %vm1388, %v1293
      %1390 = vst.msk [vmem:[#allocation2 + $0x8] sm:$0xff] %vm1388, %v1295
      %1391 = vst.msk [vmem:[#allocation2 + $0x10] sm:$0xff] %vm1388, %v1297
      %1392 = vst.msk [vmem:[#allocation2 + $0x18] sm:$0xff] %vm1388, %v1299
      %1393 = vst.msk [vmem:[#allocation2 + $0x20] sm:$0xff] %vm1388, %v1301
      %1394 = vst.msk [vmem:[#allocation2 + $0x28] sm:$0xff] %vm1388, %v1303
      %1395 = vst.msk [vmem:[#allocation2 + $0x30] sm:$0xff] %vm1388, %v1305
      %1396 = vst.msk [vmem:[#allocation2 + $0x38] sm:$0xff] %vm1388, %v1307
      %1397 = vst.msk [vmem:[#allocation2 + $0x40] sm:$0xff] %vm1388, %v1309
      %1398 = vst.msk [vmem:[#allocation2 + $0x48] sm:$0xff] %vm1388, %v1311
      %1399 = vst.msk [vmem:[#allocation2 + $0x50] sm:$0xff] %vm1388, %v1313
      %1400 = vst.msk [vmem:[#allocation2 + $0x58] sm:$0xff] %vm1388, %v1315
      %1401 = vst.msk [vmem:[#allocation2 + $0x60] sm:$0xff] %vm1388, %v1317
      %1402 = vst.msk [vmem:[#allocation2 + $0x68] sm:$0xff] %vm1388, %v1319
      %1403 = vst.msk [vmem:[#allocation2 + $0x70] sm:$0xff] %vm1388, %v1321
      %1404 = vst.msk [vmem:[#allocation2 + $0x78] sm:$0xff] %vm1388, %v1323
      %1405 = vst.msk [vmem:[#allocation2 + $0x80] sm:$0xff] %vm1388, %v1325
      %1406 = vst.msk [vmem:[#allocation2 + $0x88] sm:$0xff] %vm1388, %v1327
      %1407 = vst.msk [vmem:[#allocation2 + $0x90] sm:$0xff] %vm1388, %v1329
      %1408 = vst.msk [vmem:[#allocation2 + $0x98] sm:$0xff] %vm1388, %v1331
      %1409 = vst.msk [vmem:[#allocation2 + $0xa0] sm:$0xff] %vm1388, %v1333
      %1410 = vst.msk [vmem:[#allocation2 + $0xa8] sm:$0xff] %vm1388, %v1335
      %1411 = vst.msk [vmem:[#allocation2 + $0xb0] sm:$0xff] %vm1388, %v1337
      %1412 = vst.msk [vmem:[#allocation2 + $0xb8] sm:$0xff] %vm1388, %v1339
      %1413 = vst.msk [vmem:[#allocation2 + $0xc0] sm:$0xff] %vm1388, %v1341
      %1414 = vst.msk [vmem:[#allocation2 + $0xc8] sm:$0xff] %vm1388, %v1343
      %1415 = vst.msk [vmem:[#allocation2 + $0xd0] sm:$0xff] %vm1388, %v1345
      %1416 = vst.msk [vmem:[#allocation2 + $0xd8] sm:$0xff] %vm1388, %v1347
      %1417 = vst.msk [vmem:[#allocation2 + $0xe0] sm:$0xff] %vm1388, %v1349
      %1418 = vst.msk [vmem:[#allocation2 + $0xe8] sm:$0xff] %vm1388, %v1351
      %1419 = vst.msk [vmem:[#allocation2 + $0xf0] sm:$0xff] %vm1388, %v1353
      %1420 = vst.msk [vmem:[#allocation2 + $0xf8] sm:$0xff] %vm1388, %v1355
      %v1421 = vld [vmem:[%s192 + $0x21] sm:$0xff]
      %v1422 = vld [vmem:[%s192 + $0x29] sm:$0xff]
      %v1423 = vld [vmem:[%s192 + $0x31] sm:$0xff]
      %v1424 = vld [vmem:[%s192 + $0x39] sm:$0xff]
      %v1425 = vld [vmem:[%s192 + $0x41] sm:$0xff]
      %v1426 = vld [vmem:[%s192 + $0x49] sm:$0xff]
      %v1427 = vld [vmem:[%s192 + $0x51] sm:$0xff]
      %v1428 = vld [vmem:[%s192 + $0x59] sm:$0xff]
      %v1429 = vld [vmem:[%s192 + $0x61] sm:$0xff]
      %v1430 = vld [vmem:[%s192 + $0x69] sm:$0xff]
      %v1431 = vld [vmem:[%s192 + $0x71] sm:$0xff]
      %v1432 = vld [vmem:[%s192 + $0x79] sm:$0xff]
      %v1433 = vld [vmem:[%s192 + $0x81] sm:$0xff]
      %v1434 = vld [vmem:[%s192 + $0x89] sm:$0xff]
      %v1435 = vld [vmem:[%s192 + $0x91] sm:$0xff]
      %v1436 = vld [vmem:[%s192 + $0x99] sm:$0xff]
      %v1437 = vld [vmem:[%s192 + $0xa1] sm:$0xff]
      %v1438 = vld [vmem:[%s192 + $0xa9] sm:$0xff]
      %v1439 = vld [vmem:[%s192 + $0xb1] sm:$0xff]
      %v1440 = vld [vmem:[%s192 + $0xb9] sm:$0xff]
      %v1441 = vld [vmem:[%s192 + $0xc1] sm:$0xff]
      %v1442 = vld [vmem:[%s192 + $0xc9] sm:$0xff]
      %v1443 = vld [vmem:[%s192 + $0xd1] sm:$0xff]
      %v1444 = vld [vmem:[%s192 + $0xd9] sm:$0xff]
      %v1445 = vld [vmem:[%s192 + $0xe1] sm:$0xff]
      %v1446 = vld [vmem:[%s192 + $0xe9] sm:$0xff]
      %v1447 = vld [vmem:[%s192 + $0xf1] sm:$0xff]
      %v1448 = vld [vmem:[%s192 + $0xf9] sm:$0xff]
      %v1449 = vld [vmem:[%s192 + $0x101] sm:$0xff]
      %v1450 = vld [vmem:[%s192 + $0x109] sm:$0xff]
      %v1451 = vld [vmem:[%s192 + $0x111] sm:$0xff]
      %v1452 = vld [vmem:[%s192 + $0x119] sm:$0xff]
      %1485 = vrot.lane.b32.xlu0 %v1421, 28
      %v1486 = vpop.permute.xlu0 %1485
      %1487 = vrot.lane.b32.xlu0 %v1422, 28
      %v1488 = vpop.permute.xlu0 %1487
      %1489 = vrot.lane.b32.xlu0 %v1423, 28
      %v1490 = vpop.permute.xlu0 %1489
      %1491 = vrot.lane.b32.xlu0 %v1424, 28
      %v1492 = vpop.permute.xlu0 %1491
      %1493 = vrot.lane.b32.xlu0 %v1425, 28
      %v1494 = vpop.permute.xlu0 %1493
      %1495 = vrot.lane.b32.xlu0 %v1426, 28
      %v1496 = vpop.permute.xlu0 %1495
      %1497 = vrot.lane.b32.xlu0 %v1427, 28
      %v1498 = vpop.permute.xlu0 %1497
      %1499 = vrot.lane.b32.xlu0 %v1428, 28
      %v1500 = vpop.permute.xlu0 %1499
      %1501 = vrot.lane.b32.xlu0 %v1429, 28
      %v1502 = vpop.permute.xlu0 %1501
      %1503 = vrot.lane.b32.xlu0 %v1430, 28
      %v1504 = vpop.permute.xlu0 %1503
      %1505 = vrot.lane.b32.xlu0 %v1431, 28
      %v1506 = vpop.permute.xlu0 %1505
      %1507 = vrot.lane.b32.xlu0 %v1432, 28
      %v1508 = vpop.permute.xlu0 %1507
      %1509 = vrot.lane.b32.xlu0 %v1433, 28
      %v1510 = vpop.permute.xlu0 %1509
      %1511 = vrot.lane.b32.xlu0 %v1434, 28
      %v1512 = vpop.permute.xlu0 %1511
      %1513 = vrot.lane.b32.xlu0 %v1435, 28
      %v1514 = vpop.permute.xlu0 %1513
      %1515 = vrot.lane.b32.xlu0 %v1436, 28
      %v1516 = vpop.permute.xlu0 %1515
      %1517 = vrot.lane.b32.xlu0 %v1437, 28
      %v1518 = vpop.permute.xlu0 %1517
      %1519 = vrot.lane.b32.xlu0 %v1438, 28
      %v1520 = vpop.permute.xlu0 %1519
      %1521 = vrot.lane.b32.xlu0 %v1439, 28
      %v1522 = vpop.permute.xlu0 %1521
      %1523 = vrot.lane.b32.xlu0 %v1440, 28
      %v1524 = vpop.permute.xlu0 %1523
      %1525 = vrot.lane.b32.xlu0 %v1441, 28
      %v1526 = vpop.permute.xlu0 %1525
      %1527 = vrot.lane.b32.xlu0 %v1442, 28
      %v1528 = vpop.permute.xlu0 %1527
      %1529 = vrot.lane.b32.xlu0 %v1443, 28
      %v1530 = vpop.permute.xlu0 %1529
      %1531 = vrot.lane.b32.xlu0 %v1444, 28
      %v1532 = vpop.permute.xlu0 %1531
      %1533 = vrot.lane.b32.xlu0 %v1445, 28
      %v1534 = vpop.permute.xlu0 %1533
      %1535 = vrot.lane.b32.xlu0 %v1446, 28
      %v1536 = vpop.permute.xlu0 %1535
      %1537 = vrot.lane.b32.xlu0 %v1447, 28
      %v1538 = vpop.permute.xlu0 %1537
      %1539 = vrot.lane.b32.xlu0 %v1448, 28
      %v1540 = vpop.permute.xlu0 %1539
      %1541 = vrot.lane.b32.xlu0 %v1449, 28
      %v1542 = vpop.permute.xlu0 %1541
      %1543 = vrot.lane.b32.xlu0 %v1450, 28
      %v1544 = vpop.permute.xlu0 %1543
      %1545 = vrot.lane.b32.xlu0 %v1451, 28
      %v1546 = vpop.permute.xlu0 %1545
      %1547 = vrot.lane.b32.xlu0 %v1452, 28
      %v1548 = vpop.permute.xlu0 %1547
      %vm1581 = vcmask 261344
      %1582 = vst.msk [vmem:[#allocation2] sm:$0xff] %vm1581, %v1486
      %1583 = vst.msk [vmem:[#allocation2 + $0x8] sm:$0xff] %vm1581, %v1488
      %1584 = vst.msk [vmem:[#allocation2 + $0x10] sm:$0xff] %vm1581, %v1490
      %1585 = vst.msk [vmem:[#allocation2 + $0x18] sm:$0xff] %vm1581, %v1492
      %1586 = vst.msk [vmem:[#allocation2 + $0x20] sm:$0xff] %vm1581, %v1494
      %1587 = vst.msk [vmem:[#allocation2 + $0x28] sm:$0xff] %vm1581, %v1496
      %1588 = vst.msk [vmem:[#allocation2 + $0x30] sm:$0xff] %vm1581, %v1498
      %1589 = vst.msk [vmem:[#allocation2 + $0x38] sm:$0xff] %vm1581, %v1500
      %1590 = vst.msk [vmem:[#allocation2 + $0x40] sm:$0xff] %vm1581, %v1502
      %1591 = vst.msk [vmem:[#allocation2 + $0x48] sm:$0xff] %vm1581, %v1504
      %1592 = vst.msk [vmem:[#allocation2 + $0x50] sm:$0xff] %vm1581, %v1506
      %1593 = vst.msk [vmem:[#allocation2 + $0x58] sm:$0xff] %vm1581, %v1508
      %1594 = vst.msk [vmem:[#allocation2 + $0x60] sm:$0xff] %vm1581, %v1510
      %1595 = vst.msk [vmem:[#allocation2 + $0x68] sm:$0xff] %vm1581, %v1512
      %1596 = vst.msk [vmem:[#allocation2 + $0x70] sm:$0xff] %vm1581, %v1514
      %1597 = vst.msk [vmem:[#allocation2 + $0x78] sm:$0xff] %vm1581, %v1516
      %1598 = vst.msk [vmem:[#allocation2 + $0x80] sm:$0xff] %vm1581, %v1518
      %1599 = vst.msk [vmem:[#allocation2 + $0x88] sm:$0xff] %vm1581, %v1520
      %1600 = vst.msk [vmem:[#allocation2 + $0x90] sm:$0xff] %vm1581, %v1522
      %1601 = vst.msk [vmem:[#allocation2 + $0x98] sm:$0xff] %vm1581, %v1524
      %1602 = vst.msk [vmem:[#allocation2 + $0xa0] sm:$0xff] %vm1581, %v1526
      %1603 = vst.msk [vmem:[#allocation2 + $0xa8] sm:$0xff] %vm1581, %v1528
      %1604 = vst.msk [vmem:[#allocation2 + $0xb0] sm:$0xff] %vm1581, %v1530
      %1605 = vst.msk [vmem:[#allocation2 + $0xb8] sm:$0xff] %vm1581, %v1532
      %1606 = vst.msk [vmem:[#allocation2 + $0xc0] sm:$0xff] %vm1581, %v1534
      %1607 = vst.msk [vmem:[#allocation2 + $0xc8] sm:$0xff] %vm1581, %v1536
      %1608 = vst.msk [vmem:[#allocation2 + $0xd0] sm:$0xff] %vm1581, %v1538
      %1609 = vst.msk [vmem:[#allocation2 + $0xd8] sm:$0xff] %vm1581, %v1540
      %1610 = vst.msk [vmem:[#allocation2 + $0xe0] sm:$0xff] %vm1581, %v1542
      %1611 = vst.msk [vmem:[#allocation2 + $0xe8] sm:$0xff] %vm1581, %v1544
      %1612 = vst.msk [vmem:[#allocation2 + $0xf0] sm:$0xff] %vm1581, %v1546
      %1613 = vst.msk [vmem:[#allocation2 + $0xf8] sm:$0xff] %vm1581, %v1548
      %v1614 = vld [vmem:[%s192 + $0x22] sm:$0xff]
      %v1615 = vld [vmem:[%s192 + $0x2a] sm:$0xff]
      %v1616 = vld [vmem:[%s192 + $0x32] sm:$0xff]
      %v1617 = vld [vmem:[%s192 + $0x3a] sm:$0xff]
      %v1618 = vld [vmem:[%s192 + $0x42] sm:$0xff]
      %v1619 = vld [vmem:[%s192 + $0x4a] sm:$0xff]
      %v1620 = vld [vmem:[%s192 + $0x52] sm:$0xff]
      %v1621 = vld [vmem:[%s192 + $0x5a] sm:$0xff]
      %v1622 = vld [vmem:[%s192 + $0x62] sm:$0xff]
      %v1623 = vld [vmem:[%s192 + $0x6a] sm:$0xff]
      %v1624 = vld [vmem:[%s192 + $0x72] sm:$0xff]
      %v1625 = vld [vmem:[%s192 + $0x7a] sm:$0xff]
      %v1626 = vld [vmem:[%s192 + $0x82] sm:$0xff]
      %v1627 = vld [vmem:[%s192 + $0x8a] sm:$0xff]
      %v1628 = vld [vmem:[%s192 + $0x92] sm:$0xff]
      %v1629 = vld [vmem:[%s192 + $0x9a] sm:$0xff]
      %v1630 = vld [vmem:[%s192 + $0xa2] sm:$0xff]
      %v1631 = vld [vmem:[%s192 + $0xaa] sm:$0xff]
      %v1632 = vld [vmem:[%s192 + $0xb2] sm:$0xff]
      %v1633 = vld [vmem:[%s192 + $0xba] sm:$0xff]
      %v1634 = vld [vmem:[%s192 + $0xc2] sm:$0xff]
      %v1635 = vld [vmem:[%s192 + $0xca] sm:$0xff]
      %v1636 = vld [vmem:[%s192 + $0xd2] sm:$0xff]
      %v1637 = vld [vmem:[%s192 + $0xda] sm:$0xff]
      %v1638 = vld [vmem:[%s192 + $0xe2] sm:$0xff]
      %v1639 = vld [vmem:[%s192 + $0xea] sm:$0xff]
      %v1640 = vld [vmem:[%s192 + $0xf2] sm:$0xff]
      %v1641 = vld [vmem:[%s192 + $0xfa] sm:$0xff]
      %v1642 = vld [vmem:[%s192 + $0x102] sm:$0xff]
      %v1643 = vld [vmem:[%s192 + $0x10a] sm:$0xff]
      %v1644 = vld [vmem:[%s192 + $0x112] sm:$0xff]
      %v1645 = vld [vmem:[%s192 + $0x11a] sm:$0xff]
      %1678 = vrot.lane.b32.xlu0 %v1614, 32
      %v1679 = vpop.permute.xlu0 %1678
      %1680 = vrot.lane.b32.xlu0 %v1615, 32
      %v1681 = vpop.permute.xlu0 %1680
      %1682 = vrot.lane.b32.xlu0 %v1616, 32
      %v1683 = vpop.permute.xlu0 %1682
      %1684 = vrot.lane.b32.xlu0 %v1617, 32
      %v1685 = vpop.permute.xlu0 %1684
      %1686 = vrot.lane.b32.xlu0 %v1618, 32
      %v1687 = vpop.permute.xlu0 %1686
      %1688 = vrot.lane.b32.xlu0 %v1619, 32
      %v1689 = vpop.permute.xlu0 %1688
      %1690 = vrot.lane.b32.xlu0 %v1620, 32
      %v1691 = vpop.permute.xlu0 %1690
      %1692 = vrot.lane.b32.xlu0 %v1621, 32
      %v1693 = vpop.permute.xlu0 %1692
      %1694 = vrot.lane.b32.xlu0 %v1622, 32
      %v1695 = vpop.permute.xlu0 %1694
      %1696 = vrot.lane.b32.xlu0 %v1623, 32
      %v1697 = vpop.permute.xlu0 %1696
      %1698 = vrot.lane.b32.xlu0 %v1624, 32
      %v1699 = vpop.permute.xlu0 %1698
      %1700 = vrot.lane.b32.xlu0 %v1625, 32
      %v1701 = vpop.permute.xlu0 %1700
      %1702 = vrot.lane.b32.xlu0 %v1626, 32
      %v1703 = vpop.permute.xlu0 %1702
      %1704 = vrot.lane.b32.xlu0 %v1627, 32
      %v1705 = vpop.permute.xlu0 %1704
      %1706 = vrot.lane.b32.xlu0 %v1628, 32
      %v1707 = vpop.permute.xlu0 %1706
      %1708 = vrot.lane.b32.xlu0 %v1629, 32
      %v1709 = vpop.permute.xlu0 %1708
      %1710 = vrot.lane.b32.xlu0 %v1630, 32
      %v1711 = vpop.permute.xlu0 %1710
      %1712 = vrot.lane.b32.xlu0 %v1631, 32
      %v1713 = vpop.permute.xlu0 %1712
      %1714 = vrot.lane.b32.xlu0 %v1632, 32
      %v1715 = vpop.permute.xlu0 %1714
      %1716 = vrot.lane.b32.xlu0 %v1633, 32
      %v1717 = vpop.permute.xlu0 %1716
      %1718 = vrot.lane.b32.xlu0 %v1634, 32
      %v1719 = vpop.permute.xlu0 %1718
      %1720 = vrot.lane.b32.xlu0 %v1635, 32
      %v1721 = vpop.permute.xlu0 %1720
      %1722 = vrot.lane.b32.xlu0 %v1636, 32
      %v1723 = vpop.permute.xlu0 %1722
      %1724 = vrot.lane.b32.xlu0 %v1637, 32
      %v1725 = vpop.permute.xlu0 %1724
      %1726 = vrot.lane.b32.xlu0 %v1638, 32
      %v1727 = vpop.permute.xlu0 %1726
      %1728 = vrot.lane.b32.xlu0 %v1639, 32
      %v1729 = vpop.permute.xlu0 %1728
      %1730 = vrot.lane.b32.xlu0 %v1640, 32
      %v1731 = vpop.permute.xlu0 %1730
      %1732 = vrot.lane.b32.xlu0 %v1641, 32
      %v1733 = vpop.permute.xlu0 %1732
      %1734 = vrot.lane.b32.xlu0 %v1642, 32
      %v1735 = vpop.permute.xlu0 %1734
      %1736 = vrot.lane.b32.xlu0 %v1643, 32
      %v1737 = vpop.permute.xlu0 %1736
      %1738 = vrot.lane.b32.xlu0 %v1644, 32
      %v1739 = vpop.permute.xlu0 %1738
      %1740 = vrot.lane.b32.xlu0 %v1645, 32
      %v1741 = vpop.permute.xlu0 %1740
      %vm1774 = vcmask 294144
      %1775 = vst.msk [vmem:[#allocation2] sm:$0xff] %vm1774, %v1679
      %1776 = vst.msk [vmem:[#allocation2 + $0x8] sm:$0xff] %vm1774, %v1681
      %1777 = vst.msk [vmem:[#allocation2 + $0x10] sm:$0xff] %vm1774, %v1683
      %1778 = vst.msk [vmem:[#allocation2 + $0x18] sm:$0xff] %vm1774, %v1685
      %1779 = vst.msk [vmem:[#allocation2 + $0x20] sm:$0xff] %vm1774, %v1687
      %1780 = vst.msk [vmem:[#allocation2 + $0x28] sm:$0xff] %vm1774, %v1689
      %1781 = vst.msk [vmem:[#allocation2 + $0x30] sm:$0xff] %vm1774, %v1691
      %1782 = vst.msk [vmem:[#allocation2 + $0x38] sm:$0xff] %vm1774, %v1693
      %1783 = vst.msk [vmem:[#allocation2 + $0x40] sm:$0xff] %vm1774, %v1695
      %1784 = vst.msk [vmem:[#allocation2 + $0x48] sm:$0xff] %vm1774, %v1697
      %1785 = vst.msk [vmem:[#allocation2 + $0x50] sm:$0xff] %vm1774, %v1699
      %1786 = vst.msk [vmem:[#allocation2 + $0x58] sm:$0xff] %vm1774, %v1701
      %1787 = vst.msk [vmem:[#allocation2 + $0x60] sm:$0xff] %vm1774, %v1703
      %1788 = vst.msk [vmem:[#allocation2 + $0x68] sm:$0xff] %vm1774, %v1705
      %1789 = vst.msk [vmem:[#allocation2 + $0x70] sm:$0xff] %vm1774, %v1707
      %1790 = vst.msk [vmem:[#allocation2 + $0x78] sm:$0xff] %vm1774, %v1709
      %1791 = vst.msk [vmem:[#allocation2 + $0x80] sm:$0xff] %vm1774, %v1711
      %1792 = vst.msk [vmem:[#allocation2 + $0x88] sm:$0xff] %vm1774, %v1713
      %1793 = vst.msk [vmem:[#allocation2 + $0x90] sm:$0xff] %vm1774, %v1715
      %1794 = vst.msk [vmem:[#allocation2 + $0x98] sm:$0xff] %vm1774, %v1717
      %1795 = vst.msk [vmem:[#allocation2 + $0xa0] sm:$0xff] %vm1774, %v1719
      %1796 = vst.msk [vmem:[#allocation2 + $0xa8] sm:$0xff] %vm1774, %v1721
      %1797 = vst.msk [vmem:[#allocation2 + $0xb0] sm:$0xff] %vm1774, %v1723
      %1798 = vst.msk [vmem:[#allocation2 + $0xb8] sm:$0xff] %vm1774, %v1725
      %1799 = vst.msk [vmem:[#allocation2 + $0xc0] sm:$0xff] %vm1774, %v1727
      %1800 = vst.msk [vmem:[#allocation2 + $0xc8] sm:$0xff] %vm1774, %v1729
      %1801 = vst.msk [vmem:[#allocation2 + $0xd0] sm:$0xff] %vm1774, %v1731
      %1802 = vst.msk [vmem:[#allocation2 + $0xd8] sm:$0xff] %vm1774, %v1733
      %1803 = vst.msk [vmem:[#allocation2 + $0xe0] sm:$0xff] %vm1774, %v1735
      %1804 = vst.msk [vmem:[#allocation2 + $0xe8] sm:$0xff] %vm1774, %v1737
      %1805 = vst.msk [vmem:[#allocation2 + $0xf0] sm:$0xff] %vm1774, %v1739
      %1806 = vst.msk [vmem:[#allocation2 + $0xf8] sm:$0xff] %vm1774, %v1741
      %v1807 = vld [vmem:[#allocation2] sm:$0xff]
      %v1808 = vld [vmem:[#allocation2 + $0x8] sm:$0xff]
      %v1809 = vld [vmem:[#allocation2 + $0x10] sm:$0xff]
      %v1810 = vld [vmem:[#allocation2 + $0x18] sm:$0xff]
      %v1811 = vld [vmem:[#allocation2 + $0x20] sm:$0xff]
      %v1812 = vld [vmem:[#allocation2 + $0x28] sm:$0xff]
      %v1813 = vld [vmem:[#allocation2 + $0x30] sm:$0xff]
      %v1814 = vld [vmem:[#allocation2 + $0x38] sm:$0xff]
      %v1815 = vld [vmem:[#allocation2 + $0x40] sm:$0xff]
      %v1816 = vld [vmem:[#allocation2 + $0x48] sm:$0xff]
      %v1817 = vld [vmem:[#allocation2 + $0x50] sm:$0xff]
      %v1818 = vld [vmem:[#allocation2 + $0x58] sm:$0xff]
      %v1819 = vld [vmem:[#allocation2 + $0x60] sm:$0xff]
      %v1820 = vld [vmem:[#allocation2 + $0x68] sm:$0xff]
      %v1821 = vld [vmem:[#allocation2 + $0x70] sm:$0xff]
      %v1822 = vld [vmem:[#allocation2 + $0x78] sm:$0xff]
      %v1823 = vld [vmem:[#allocation2 + $0x80] sm:$0xff]
      %v1824 = vld [vmem:[#allocation2 + $0x88] sm:$0xff]
      %v1825 = vld [vmem:[#allocation2 + $0x90] sm:$0xff]
      %v1826 = vld [vmem:[#allocation2 + $0x98] sm:$0xff]
      %v1827 = vld [vmem:[#allocation2 + $0xa0] sm:$0xff]
      %v1828 = vld [vmem:[#allocation2 + $0xa8] sm:$0xff]
      %v1829 = vld [vmem:[#allocation2 + $0xb0] sm:$0xff]
      %v1830 = vld [vmem:[#allocation2 + $0xb8] sm:$0xff]
      %v1831 = vld [vmem:[#allocation2 + $0xc0] sm:$0xff]
      %v1832 = vld [vmem:[#allocation2 + $0xc8] sm:$0xff]
      %v1833 = vld [vmem:[#allocation2 + $0xd0] sm:$0xff]
      %v1834 = vld [vmem:[#allocation2 + $0xd8] sm:$0xff]
      %v1835 = vld [vmem:[#allocation2 + $0xe0] sm:$0xff]
      %v1836 = vld [vmem:[#allocation2 + $0xe8] sm:$0xff]
      %v1837 = vld [vmem:[#allocation2 + $0xf0] sm:$0xff]
      %v1838 = vld [vmem:[#allocation2 + $0xf8] sm:$0xff]
      %v1839 = vld [vmem:[%s1] sm:$0xff]
      %v1840 = vld [vmem:[%s1 + $0x8] sm:$0xff]
      %v1841 = vld [vmem:[%s1 + $0x10] sm:$0xff]
      %v1842 = vld [vmem:[%s1 + $0x18] sm:$0xff]
      %v1843 = vld [vmem:[%s1 + $0x20] sm:$0xf]
      %vm1844 = vcmask 293888
      %v1846 = vsel %vm1844, %v1807, 0
      %v1849 = vsel %vm1844, %v1808, 0
      %v1852 = vsel %vm1844, %v1809, 0
      %v1855 = vsel %vm1844, %v1810, 0
      %v1858 = vsel %vm1844, %v1811, 0
      %v1861 = vsel %vm1844, %v1812, 0
      %v1864 = vsel %vm1844, %v1813, 0
      %v1867 = vsel %vm1844, %v1814, 0
      %v1870 = vsel %vm1844, %v1815, 0
      %v1873 = vsel %vm1844, %v1816, 0
      %v1876 = vsel %vm1844, %v1817, 0
      %v1879 = vsel %vm1844, %v1818, 0
      %v1882 = vsel %vm1844, %v1819, 0
      %v1885 = vsel %vm1844, %v1820, 0
      %v1888 = vsel %vm1844, %v1821, 0
      %v1891 = vsel %vm1844, %v1822, 0
      %v1894 = vsel %vm1844, %v1823, 0
      %v1897 = vsel %vm1844, %v1824, 0
      %v1900 = vsel %vm1844, %v1825, 0
      %v1903 = vsel %vm1844, %v1826, 0
      %v1906 = vsel %vm1844, %v1827, 0
      %v1909 = vsel %vm1844, %v1828, 0
      %v1912 = vsel %vm1844, %v1829, 0
      %v1915 = vsel %vm1844, %v1830, 0
      %v1918 = vsel %vm1844, %v1831, 0
      %v1921 = vsel %vm1844, %v1832, 0
      %v1924 = vsel %vm1844, %v1833, 0
      %v1927 = vsel %vm1844, %v1834, 0
      %v1930 = vsel %vm1844, %v1835, 0
      %v1933 = vsel %vm1844, %v1836, 0
      %v1936 = vsel %vm1844, %v1837, 0
      %v1939 = vsel %vm1844, %v1838, 0
      %vm1941 = vcmask 1043456
      %v1943 = vsel %vm1941, %v1843, 0
      %1945 = vmatpush.msra.mxu0 0.0
      %1946 = vmatpush.msra.mxu0 0.0
      %1947 = vmatpush.msra.mxu0 0.0
      %1948 = vmatpush.msra.mxu0 0.0
      %1949 = vmatpush.msra.mxu0 0.0
      %1950 = vmatpush.msra.mxu0 0.0
      %1951 = vmatpush.msra.mxu0 0.0
      %1952 = vmatpush.msra.mxu0 0.0
      %1953 = vmatpush.msra.mxu0 0.0
      %1954 = vmatpush.msra.mxu0 0.0
      %1955 = vmatpush.msra.mxu0 0.0
      %1956 = vmatpush.msra.mxu0 %v1943
      %1957 = vmatpush.msra.mxu0 %v1842
      %1958 = vmatpush.msra.mxu0 %v1841
      %1959 = vmatpush.msra.mxu0 %v1840
      %1960 = vmatpush.msra.mxu0 %v1839
      %1961 = vmatmul.f32.gmra.mxu0 %v1846
      %v1962 = vpop.f32.mrf.mxu0
      %v1963 = vadd.f32 0.0, %v1962
      %1964 = vmatmul.f32.gmra.mxu0 %v1849
      %v1965 = vpop.f32.mrf.mxu0
      %v1966 = vadd.f32 0.0, %v1965
      %1967 = vmatmul.f32.gmra.mxu0 %v1852
      %v1968 = vpop.f32.mrf.mxu0
      %v1969 = vadd.f32 0.0, %v1968
      %1970 = vmatmul.f32.gmra.mxu0 %v1855
      %v1971 = vpop.f32.mrf.mxu0
      %v1972 = vadd.f32 0.0, %v1971
      %1973 = vmatmul.f32.gmra.mxu0 %v1858
      %v1974 = vpop.f32.mrf.mxu0
      %v1975 = vadd.f32 0.0, %v1974
      %1976 = vmatmul.f32.gmra.mxu0 %v1861
      %v1977 = vpop.f32.mrf.mxu0
      %v1978 = vadd.f32 0.0, %v1977
      %1979 = vmatmul.f32.gmra.mxu0 %v1864
      %v1980 = vpop.f32.mrf.mxu0
      %v1981 = vadd.f32 0.0, %v1980
      %1982 = vmatmul.f32.gmra.mxu0 %v1867
      %v1983 = vpop.f32.mrf.mxu0
      %v1984 = vadd.f32 0.0, %v1983
      %1985 = vmatmul.f32.gmra.mxu0 %v1870
      %v1986 = vpop.f32.mrf.mxu0
      %v1987 = vadd.f32 0.0, %v1986
      %1988 = vmatmul.f32.gmra.mxu0 %v1873
      %v1989 = vpop.f32.mrf.mxu0
      %v1990 = vadd.f32 0.0, %v1989
      %1991 = vmatmul.f32.gmra.mxu0 %v1876
      %v1992 = vpop.f32.mrf.mxu0
      %v1993 = vadd.f32 0.0, %v1992
      %1994 = vmatmul.f32.gmra.mxu0 %v1879
      %v1995 = vpop.f32.mrf.mxu0
      %v1996 = vadd.f32 0.0, %v1995
      %1997 = vmatmul.f32.gmra.mxu0 %v1882
      %v1998 = vpop.f32.mrf.mxu0
      %v1999 = vadd.f32 0.0, %v1998
      %2000 = vmatmul.f32.gmra.mxu0 %v1885
      %v2001 = vpop.f32.mrf.mxu0
      %v2002 = vadd.f32 0.0, %v2001
      %2003 = vmatmul.f32.gmra.mxu0 %v1888
      %v2004 = vpop.f32.mrf.mxu0
      %v2005 = vadd.f32 0.0, %v2004
      %2006 = vmatmul.f32.gmra.mxu0 %v1891
      %v2007 = vpop.f32.mrf.mxu0
      %v2008 = vadd.f32 0.0, %v2007
      %2009 = vmatmul.f32.gmra.mxu0 %v1894
      %v2010 = vpop.f32.mrf.mxu0
      %v2011 = vadd.f32 0.0, %v2010
      %2012 = vmatmul.f32.gmra.mxu0 %v1897
      %v2013 = vpop.f32.mrf.mxu0
      %v2014 = vadd.f32 0.0, %v2013
      %2015 = vmatmul.f32.gmra.mxu0 %v1900
      %v2016 = vpop.f32.mrf.mxu0
      %v2017 = vadd.f32 0.0, %v2016
      %2018 = vmatmul.f32.gmra.mxu0 %v1903
      %v2019 = vpop.f32.mrf.mxu0
      %v2020 = vadd.f32 0.0, %v2019
      %2021 = vmatmul.f32.gmra.mxu0 %v1906
      %v2022 = vpop.f32.mrf.mxu0
      %v2023 = vadd.f32 0.0, %v2022
      %2024 = vmatmul.f32.gmra.mxu0 %v1909
      %v2025 = vpop.f32.mrf.mxu0
      %v2026 = vadd.f32 0.0, %v2025
      %2027 = vmatmul.f32.gmra.mxu0 %v1912
      %v2028 = vpop.f32.mrf.mxu0
      %v2029 = vadd.f32 0.0, %v2028
      %2030 = vmatmul.f32.gmra.mxu0 %v1915
      %v2031 = vpop.f32.mrf.mxu0
      %v2032 = vadd.f32 0.0, %v2031
      %2033 = vmatmul.f32.gmra.mxu0 %v1918
      %v2034 = vpop.f32.mrf.mxu0
      %v2035 = vadd.f32 0.0, %v2034
      %2036 = vmatmul.f32.gmra.mxu0 %v1921
      %v2037 = vpop.f32.mrf.mxu0
      %v2038 = vadd.f32 0.0, %v2037
      %2039 = vmatmul.f32.gmra.mxu0 %v1924
      %v2040 = vpop.f32.mrf.mxu0
      %v2041 = vadd.f32 0.0, %v2040
      %2042 = vmatmul.f32.gmra.mxu0 %v1927
      %v2043 = vpop.f32.mrf.mxu0
      %v2044 = vadd.f32 0.0, %v2043
      %2045 = vmatmul.f32.gmra.mxu0 %v1930
      %v2046 = vpop.f32.mrf.mxu0
      %v2047 = vadd.f32 0.0, %v2046
      %2048 = vmatmul.f32.gmra.mxu0 %v1933
      %v2049 = vpop.f32.mrf.mxu0
      %v2050 = vadd.f32 0.0, %v2049
      %2051 = vmatmul.f32.gmra.mxu0 %v1936
      %v2052 = vpop.f32.mrf.mxu0
      %v2053 = vadd.f32 0.0, %v2052
      %2054 = vmatmul.f32.gmra.mxu0 %v1939
      %v2055 = vpop.f32.mrf.mxu0
      %v2056 = vadd.f32 0.0, %v2055
      %2057 = vdwg.mxu0
      %v2058 = vld [vmem:[%s2] sm:$0x1]
      %v2060 = vperm.slane %v2058, 0
      %v2062 = vmul.f32 %v1963, %v2060
      %v2063 = vmul.f32 %v1966, %v2060
      %v2064 = vmul.f32 %v1969, %v2060
      %v2065 = vmul.f32 %v1972, %v2060
      %v2066 = vmul.f32 %v1975, %v2060
      %v2067 = vmul.f32 %v1978, %v2060
      %v2068 = vmul.f32 %v1981, %v2060
      %v2069 = vmul.f32 %v1984, %v2060
      %v2070 = vmul.f32 %v1987, %v2060
      %v2071 = vmul.f32 %v1990, %v2060
      %v2072 = vmul.f32 %v1993, %v2060
      %v2073 = vmul.f32 %v1996, %v2060
      %v2074 = vmul.f32 %v1999, %v2060
      %v2075 = vmul.f32 %v2002, %v2060
      %v2076 = vmul.f32 %v2005, %v2060
      %v2077 = vmul.f32 %v2008, %v2060
      %v2078 = vmul.f32 %v2011, %v2060
      %v2079 = vmul.f32 %v2014, %v2060
      %v2080 = vmul.f32 %v2017, %v2060
      %v2081 = vmul.f32 %v2020, %v2060
      %v2082 = vmul.f32 %v2023, %v2060
      %v2083 = vmul.f32 %v2026, %v2060
      %v2084 = vmul.f32 %v2029, %v2060
      %v2085 = vmul.f32 %v2032, %v2060
      %v2086 = vmul.f32 %v2035, %v2060
      %v2087 = vmul.f32 %v2038, %v2060
      %v2088 = vmul.f32 %v2041, %v2060
      %v2089 = vmul.f32 %v2044, %v2060
      %v2090 = vmul.f32 %v2047, %v2060
      %v2091 = vmul.f32 %v2050, %v2060
      %v2092 = vmul.f32 %v2053, %v2060
      %v2093 = vmul.f32 %v2056, %v2060
      %v2094 = vld [vmem:[%s3] sm:$0x1]
      %v2096 = vperm.slane %v2094, 0
      %v2098 = vadd.f32 %v2062, %v2096
      %v2099 = vadd.f32 %v2063, %v2096
      %v2100 = vadd.f32 %v2064, %v2096
      %v2101 = vadd.f32 %v2065, %v2096
      %v2102 = vadd.f32 %v2066, %v2096
      %v2103 = vadd.f32 %v2067, %v2096
      %v2104 = vadd.f32 %v2068, %v2096
      %v2105 = vadd.f32 %v2069, %v2096
      %v2106 = vadd.f32 %v2070, %v2096
      %v2107 = vadd.f32 %v2071, %v2096
      %v2108 = vadd.f32 %v2072, %v2096
      %v2109 = vadd.f32 %v2073, %v2096
      %v2110 = vadd.f32 %v2074, %v2096
      %v2111 = vadd.f32 %v2075, %v2096
      %v2112 = vadd.f32 %v2076, %v2096
      %v2113 = vadd.f32 %v2077, %v2096
      %v2114 = vadd.f32 %v2078, %v2096
      %v2115 = vadd.f32 %v2079, %v2096
      %v2116 = vadd.f32 %v2080, %v2096
      %v2117 = vadd.f32 %v2081, %v2096
      %v2118 = vadd.f32 %v2082, %v2096
      %v2119 = vadd.f32 %v2083, %v2096
      %v2120 = vadd.f32 %v2084, %v2096
      %v2121 = vadd.f32 %v2085, %v2096
      %v2122 = vadd.f32 %v2086, %v2096
      %v2123 = vadd.f32 %v2087, %v2096
      %v2124 = vadd.f32 %v2088, %v2096
      %v2125 = vadd.f32 %v2089, %v2096
      %v2126 = vadd.f32 %v2090, %v2096
      %v2127 = vadd.f32 %v2091, %v2096
      %v2128 = vadd.f32 %v2092, %v2096
      %v2129 = vadd.f32 %v2093, %v2096
      %v2130 = vmax.f32 %v2098, 0.0
      %v2131 = vmax.f32 %v2099, 0.0
      %v2132 = vmax.f32 %v2100, 0.0
      %v2133 = vmax.f32 %v2101, 0.0
      %v2134 = vmax.f32 %v2102, 0.0
      %v2135 = vmax.f32 %v2103, 0.0
      %v2136 = vmax.f32 %v2104, 0.0
      %v2137 = vmax.f32 %v2105, 0.0
      %v2138 = vmax.f32 %v2106, 0.0
      %v2139 = vmax.f32 %v2107, 0.0
      %v2140 = vmax.f32 %v2108, 0.0
      %v2141 = vmax.f32 %v2109, 0.0
      %v2142 = vmax.f32 %v2110, 0.0
      %v2143 = vmax.f32 %v2111, 0.0
      %v2144 = vmax.f32 %v2112, 0.0
      %v2145 = vmax.f32 %v2113, 0.0
      %v2146 = vmax.f32 %v2114, 0.0
      %v2147 = vmax.f32 %v2115, 0.0
      %v2148 = vmax.f32 %v2116, 0.0
      %v2149 = vmax.f32 %v2117, 0.0
      %v2150 = vmax.f32 %v2118, 0.0
      %v2151 = vmax.f32 %v2119, 0.0
      %v2152 = vmax.f32 %v2120, 0.0
      %v2153 = vmax.f32 %v2121, 0.0
      %v2154 = vmax.f32 %v2122, 0.0
      %v2155 = vmax.f32 %v2123, 0.0
      %v2156 = vmax.f32 %v2124, 0.0
      %v2157 = vmax.f32 %v2125, 0.0
      %v2158 = vmax.f32 %v2126, 0.0
      %v2159 = vmax.f32 %v2127, 0.0
      %v2160 = vmax.f32 %v2128, 0.0
      %v2161 = vmax.f32 %v2129, 0.0
      %2162 = vst [vmem:[%s197] sm:$0xff] %v2130
      %2163 = vst [vmem:[%s197 + $0x8] sm:$0xff] %v2131
      %2164 = vst [vmem:[%s197 + $0x10] sm:$0xff] %v2132
      %2165 = vst [vmem:[%s197 + $0x18] sm:$0xff] %v2133
      %2166 = vst [vmem:[%s197 + $0x20] sm:$0xff] %v2134
      %2167 = vst [vmem:[%s197 + $0x28] sm:$0xff] %v2135
      %2168 = vst [vmem:[%s197 + $0x30] sm:$0xff] %v2136
      %2169 = vst [vmem:[%s197 + $0x38] sm:$0xff] %v2137
      %2170 = vst [vmem:[%s197 + $0x40] sm:$0xff] %v2138
      %2171 = vst [vmem:[%s197 + $0x48] sm:$0xff] %v2139
      %2172 = vst [vmem:[%s197 + $0x50] sm:$0xff] %v2140
      %2173 = vst [vmem:[%s197 + $0x58] sm:$0xff] %v2141
      %2174 = vst [vmem:[%s197 + $0x60] sm:$0xff] %v2142
      %2175 = vst [vmem:[%s197 + $0x68] sm:$0xff] %v2143
      %2176 = vst [vmem:[%s197 + $0x70] sm:$0xff] %v2144
      %2177 = vst [vmem:[%s197 + $0x78] sm:$0xff] %v2145
      %2178 = vst [vmem:[%s197 + $0x80] sm:$0xff] %v2146
      %2179 = vst [vmem:[%s197 + $0x88] sm:$0xff] %v2147
      %2180 = vst [vmem:[%s197 + $0x90] sm:$0xff] %v2148
      %2181 = vst [vmem:[%s197 + $0x98] sm:$0xff] %v2149
      %2182 = vst [vmem:[%s197 + $0xa0] sm:$0xff] %v2150
      %2183 = vst [vmem:[%s197 + $0xa8] sm:$0xff] %v2151
      %2184 = vst [vmem:[%s197 + $0xb0] sm:$0xff] %v2152
      %2185 = vst [vmem:[%s197 + $0xb8] sm:$0xff] %v2153
      %2186 = vst [vmem:[%s197 + $0xc0] sm:$0xff] %v2154
      %2187 = vst [vmem:[%s197 + $0xc8] sm:$0xff] %v2155
      %2188 = vst [vmem:[%s197 + $0xd0] sm:$0xff] %v2156
      %2189 = vst [vmem:[%s197 + $0xd8] sm:$0xff] %v2157
      %2190 = vst [vmem:[%s197 + $0xe0] sm:$0xff] %v2158
      %2191 = vst [vmem:[%s197 + $0xe8] sm:$0xff] %v2159
      %2192 = vst [vmem:[%s197 + $0xf0] sm:$0xff] %v2160
      %2193 = vst [vmem:[%s197 + $0xf8] sm:$0xff] %v2161
      %p2194 = scmp.lt.s32.totalorder %s15, 1
      %s2195 = scalar_select %p2194, %s15, 1
      %s2196 = smul.addr %s2195, 32
      %s2197 = smul.addr %s2196, 8
      %s2198 = scalar_lea.vmem %s4, %s2197
      // Predicated region
      $region37: #{conv_module_forward.1} parent=35 // pred_check
        %p2199 = pneg %p122
      $region38: #{conv_module_forward.1} parent=35 // pred_check_branch
        %2201 = sbr.rel (%p2199) target = $region40
      $region39: #{conv_module_forward.1} parent=35 // pred_region
        _
      $region40: #{conv_module_forward.1} parent=35 // pred_fallthru
        _
    $region36: #{conv_module_forward.1} parent=5 // pred_fallthru
      _
    %p2202 = scmp.le.s32.totalorder 2, %s10
    // Predicated region
    $region41: #{conv_module_forward.1} parent=5 // pred_check
      %p2203 = pneg %p2202
    $region42: #{conv_module_forward.1} parent=5 // pred_check_branch
      %2205 = sbr.rel (%p2203) target = $region44
    $region43: #{conv_module_forward.1} parent=5 // pred_region
      %s2206 = ssub.s32 %s10, 2
      // Predicated region
      $region45: #{conv_module_forward.1} parent=43 // pred_check
        %p2207 = pneg %p128
      $region46: #{conv_module_forward.1} parent=43 // pred_check_branch
        %2209 = sbr.rel (%p2207) target = $region48
      $region47: #{conv_module_forward.1} parent=43 // pred_region
        %p2210 = scmp.lt.s32.totalorder %s16, 1
        %s2211 = scalar_select %p2210, %s16, 1
        %s2212 = smul.addr %s2211, 32
        %s2213 = smul.addr %s2212, 8
        %s2214 = scalar_lea.vmem %s4, %s2213
      $region48: #{conv_module_forward.1} parent=43 // pred_fallthru
        _
    $region44: #{conv_module_forward.1} parent=5 // pred_fallthru
      _
  $region6: #{conv_module_forward.1} parent=0 // loop_footer
    %s14 = sadd.s32 1, %s10
  $region7: #{conv_module_forward.1} parent=0 // loop_footer_branch
    %9 = sbr.rel target = $region3
  $region8: #{conv_module_forward.1} parent=0 // loop_exit
    _

</llo_original>
